<compile_context>
chip_gen: v7x
topology: tpu7x:2x2x1
jax: 0.10.0
libtpu: 0.0.40
codegen_flags: <defaults>
</compile_context>

<pallas_src>
import functools

import jax
import jax.numpy as jnp
from jax.experimental import pallas as pl
from jax.experimental.pallas import tpu as pltpu

# ----------------------------------------------------------------------------
# Synthetic config (small shapes)
# ----------------------------------------------------------------------------
NUM_CLASS = 8
NUM_HEADING_BIN = 4
NUM_SIZE_CLUSTER = 4
NUM_PROPOSAL = 16
SEED_FEAT_DIM = 256
SA_RADIUS = 0.3
SA_NSAMPLE = 16
HIDDEN = 128
DOUT = 2 + 3 + NUM_HEADING_BIN * 2 + NUM_SIZE_CLUSTER * 4 + NUM_CLASS  # = 37
DOUT_PAD = 128                                                          # lane-dense
BN_EPS = 1e-5


# ----------------------------------------------------------------------------
# Pallas kernel: fused SA shared-MLP + max-pool + proposal head
# ----------------------------------------------------------------------------
def _fused_sa_head_kernel(gx_ref, gf_ref, w0x_ref, w0f_ref, wstk_ref,
                          shifts_ref, o_ref):
    # Packed per-layer shift / bias rows (f32).
    t0 = shifts_ref[0:1, :]
    t1 = shifts_ref[1:2, :]
    t2 = shifts_ref[2:3, :]
    ht1 = shifts_ref[3:4, :]
    ht2 = shifts_ref[4:5, :]
    hb3 = shifts_ref[5:6, :]

    # ---- SA shared MLP over all R = B*P*nsample grouped points -------------
    # BN scales are pre-folded into the weights; bf16 MXU inputs, f32
    # accumulation, f32 epilogue (shift + relu).
    h = (jnp.dot(gf_ref[...], w0f_ref[...], preferred_element_type=jnp.float32)
         + jnp.dot(gx_ref[...], w0x_ref[...], preferred_element_type=jnp.float32))
    h = jnp.maximum(h + t0, 0.0)                                    # bn0 + relu
    h = jnp.dot(h.astype(jnp.bfloat16), wstk_ref[0],
                preferred_element_type=jnp.float32)
    h = jnp.maximum(h + t1, 0.0)                                    # bn1 + relu
    h = jnp.dot(h.astype(jnp.bfloat16), wstk_ref[1],
                preferred_element_type=jnp.float32)
    h = jnp.maximum(h + t2, 0.0)                                    # bn2 + relu

    # ---- max-pool over nsample ----------------------------------------------
    # Rows are (b, p, ns)-ordered; NS is a multiple of 8 so the reshape is
    # sublane-tile aligned and the axis=1 reduce goes to the XLU (has slack).
    bp = o_ref.shape[0]
    ns = gf_ref.shape[0] // bp
    f = jnp.max(h.reshape(bp, ns, h.shape[-1]), axis=1)             # (BP, 128)

    # ---- proposal head: conv1+bn1+relu, conv2+bn2+relu, conv3 (padded) ------
    g = jnp.dot(f.astype(jnp.bfloat16), wstk_ref[2],
                preferred_element_type=jnp.float32)
    g = jnp.maximum(g + ht1, 0.0)
    g = jnp.dot(g.astype(jnp.bfloat16), wstk_ref[3],
                preferred_element_type=jnp.float32)
    g = jnp.maximum(g + ht2, 0.0)
    o_ref[...] = (jnp.dot(g.astype(jnp.bfloat16), wstk_ref[4],
                          preferred_element_type=jnp.float32)
                  + hb3)                                             # (BP, 128)


def fused_sa_and_head(grouped_xyz, grouped_feats, params):
    """grouped_xyz (B,P,ns,3) normalized, grouped_feats (B,P,ns,C)
       -> padded head output (B*P, DOUT_PAD) in f32."""
    B, P, NS, _ = grouped_xyz.shape
    C = grouped_feats.shape[-1]
    BP = B * P
    R = BP * NS

    # Natural (b, p, ns) row order: plain reshapes, no transpose HLOs.
    # xyz is zero-padded K=3 -> K=8 so its contribution rides the MXU too.
    gx = jnp.pad(grouped_xyz.reshape(R, 3), ((0, 0), (0, 5))).astype(jnp.bfloat16)
    gf = grouped_feats.reshape(R, C).astype(jnp.bfloat16)

    flops = (2 * R * (8 * HIDDEN + C * HIDDEN + 2 * HIDDEN * HIDDEN)
             + 2 * BP * (2 * HIDDEN * HIDDEN + HIDDEN * DOUT_PAD))
    bytes_accessed = (2 * (R * (8 + C) + (8 + C) * HIDDEN + 5 * HIDDEN * HIDDEN)
                      + 4 * (6 * HIDDEN + BP * DOUT_PAD))

    vmem = pl.BlockSpec(memory_space=pltpu.MemorySpace.VMEM)
    return pl.pallas_call(
        _fused_sa_head_kernel,
        out_shape=jax.ShapeDtypeStruct((BP, DOUT_PAD), jnp.float32),
        in_specs=[vmem] * 6,
        out_specs=vmem,
        cost_estimate=pl.CostEstimate(flops=flops, transcendentals=0,
                                      bytes_accessed=bytes_accessed),
    )(gx, gf, params['w0x'], params['w0f'], params['wstack'], params['shifts'])


# ----------------------------------------------------------------------------
# Plain-JAX glue: data-dependent vote aggregation (FPS + ball query + gather)
# ----------------------------------------------------------------------------
def gather_points(points, idx):
    """points (B, N, D), idx (B, ...) int -> (B, ..., D)."""
    return jax.vmap(lambda p, i: p[i])(points, idx)


def furthest_point_sample(xyz, npoint):
    """Deterministic FPS, xyz (B, N, 3) -> indices (B, npoint)."""
    B, N, _ = xyz.shape

    def body(i, state):
        idxs, dists, last = state
        last_xyz = jax.vmap(lambda p, j: p[j])(xyz, last)            # (B, 3)
        d = jnp.sum((xyz - last_xyz[:, None, :]) ** 2, axis=-1)      # (B, N)
        dists = jnp.minimum(dists, d)
        nxt = jnp.argmax(dists, axis=-1).astype(jnp.int32)
        idxs = idxs.at[:, i].set(nxt)
        return idxs, dists, nxt

    idxs0 = jnp.zeros((B, npoint), jnp.int32)
    dists0 = jnp.full((B, N), 1e10, jnp.float32)
    last0 = jnp.zeros((B,), jnp.int32)
    idxs, _, _ = jax.lax.fori_loop(1, npoint, body, (idxs0, dists0, last0))
    return idxs


def ball_query(radius, nsample, xyz, new_xyz):
    """xyz (B,N,3), new_xyz (B,P,3) -> neighbor indices (B,P,nsample).

    top_k (not a full argsort): in-ball points rank first, ordered by ascending
    index (matches the CUDA op's 'first nsample in the ball'); missing slots
    are filled with the first valid neighbor.  NOTE: if NO point were inside
    the radius this falls back to the nearest-index out-of-ball point rather
    than index 0 (benign here since query centers come from xyz itself, so the
    center is always inside its own ball).
    """
    B, N, _ = xyz.shape
    d2 = jnp.sum((new_xyz[:, :, None, :] - xyz[:, None, :, :]) ** 2, axis=-1)
    within = d2 < radius ** 2
    ar = jnp.arange(N, dtype=jnp.int32)
    key = jnp.where(within, 2 * N - ar[None, None, :], N - ar[None, None, :])
    _, order = jax.lax.top_k(key, nsample)
    order = order.astype(jnp.int32)
    valid = jnp.take_along_axis(within, order, axis=-1)
    first = order[..., :1]
    return jnp.where(valid, order, first)


# ----------------------------------------------------------------------------
# decode_scores (net in (B, P, DOUT) layout, i.e. already "transposed");
# matches the provided reference decode_scores (normalized residuals only).
# ----------------------------------------------------------------------------
def decode_scores(net, end_points, num_heading_bin, num_size_cluster):
    B, P, _ = net.shape
    end_points['objectness_scores'] = net[:, :, 0:2]
    base_xyz = end_points['aggregated_vote_xyz']
    end_points['center'] = base_xyz + net[:, :, 2:5]
    end_points['heading_scores'] = net[:, :, 5:5 + num_heading_bin]
    end_points['heading_residuals_normalized'] = \
        net[:, :, 5 + num_heading_bin:5 + num_heading_bin * 2]
    o = 5 + num_heading_bin * 2
    end_points['size_scores'] = net[:, :, o:o + num_size_cluster]
    end_points['size_residuals_normalized'] = \
        net[:, :, o + num_size_cluster:o + num_size_cluster * 4].reshape(
            B, P, num_size_cluster, 3)
    end_points['sem_cls_scores'] = net[:, :, o + num_size_cluster * 4:]
    return end_points


# ----------------------------------------------------------------------------
# Full forward (sampling == 'vote_fps')
# ----------------------------------------------------------------------------
@functools.partial(jax.jit)
def proposal_module_forward(xyz, features, params):
    end_points = {}
    B, N, _ = xyz.shape

    # PointnetSAModuleVotes grouping (use_xyz=True, normalize_xyz=True).
    fps_inds = furthest_point_sample(xyz, NUM_PROPOSAL)              # (B,P)
    new_xyz = gather_points(xyz, fps_inds)                           # (B,P,3)
    idx = ball_query(SA_RADIUS, SA_NSAMPLE, xyz, new_xyz)            # (B,P,ns)
    grouped_xyz = gather_points(xyz, idx)                            # (B,P,ns,3)
    grouped_xyz = (grouped_xyz - new_xyz[:, :, None, :]) / SA_RADIUS
    feats_nlast = jnp.transpose(features, (0, 2, 1))                 # (B,N,C)
    grouped_feats = gather_points(feats_nlast, idx)                  # (B,P,ns,C)

    end_points['aggregated_vote_xyz'] = new_xyz
    end_points['aggregated_vote_inds'] = fps_inds

    # Fused Pallas kernel: SA shared MLP + max-pool + proposal head.
    net_pad = fused_sa_and_head(grouped_xyz, grouped_feats, params)  # (B*P,128)
    net = net_pad.reshape(B, NUM_PROPOSAL, DOUT_PAD)[:, :, :DOUT]    # (B,P,37)

    end_points = decode_scores(net, end_points, NUM_HEADING_BIN, NUM_SIZE_CLUSTER)
    return end_points


# ----------------------------------------------------------------------------
# Deterministic parameter init (synthetic; no checkpoint).
# BN eval fold assumes running_mean=0, running_var=1; real checkpoints would
# fold their actual running stats into the weight scaling / shift vectors.
# ----------------------------------------------------------------------------
def _affine(dim, phase=0.0):
    i = jnp.arange(dim, dtype=jnp.float32)
    gamma = 1.0 + 0.05 * jnp.cos(i + phase)
    beta = 0.05 * jnp.sin(i + phase)
    return gamma, beta


def init_params(key):
    keys = jax.random.split(key, 9)
    inv = 1.0 / jnp.sqrt(1.0 + BN_EPS)   # BN eval: mean=0, var=1

    # --- SA shared MLP [256+3, 128, 128, 128] (conv bias absent, bn=True) ----
    w0x = 0.05 * jax.random.normal(keys[0], (3, HIDDEN), jnp.float32)
    w0f = 0.05 * jax.random.normal(keys[1], (SEED_FEAT_DIM, HIDDEN), jnp.float32)
    g0, be0 = _affine(HIDDEN, 0.0)
    w1 = 0.05 * jax.random.normal(keys[2], (HIDDEN, HIDDEN), jnp.float32)
    g1, be1 = _affine(HIDDEN, 1.0)
    w2 = 0.05 * jax.random.normal(keys[3], (HIDDEN, HIDDEN), jnp.float32)
    g2, be2 = _affine(HIDDEN, 2.0)

    # --- Head: conv1/bn1, conv2/bn2, conv3 (1x1 convs -> dense weights) ------
    hw1 = 0.05 * jax.random.normal(keys[4], (HIDDEN, HIDDEN), jnp.float32)
    hb1 = 0.05 * jax.random.normal(keys[5], (HIDDEN,), jnp.float32)
    hw2 = 0.05 * jax.random.normal(keys[6], (HIDDEN, HIDDEN), jnp.float32)
    hb2 = 0.05 * jax.random.normal(keys[7], (HIDDEN,), jnp.float32)
    hw3 = 0.05 * jax.random.normal(keys[8], (HIDDEN, DOUT), jnp.float32)
    hb3 = 0.02 * jnp.sin(jnp.arange(DOUT, dtype=jnp.float32))
    hg1, hbe1 = _affine(HIDDEN, 3.0)
    hg2, hbe2 = _affine(HIDDEN, 4.0)

    # Fold BN scales column-wise into the weights:
    #   bn(x @ W + b) = x @ (W * s) + (s*b + beta),  s = gamma / sqrt(var+eps).
    s0, s1, s2 = g0 * inv, g1 * inv, g2 * inv
    hs1, hs2 = hg1 * inv, hg2 * inv
    w0x_f = w0x * s0[None, :]
    w0f_f = w0f * s0[None, :]
    w1_f = w1 * s1[None, :]
    w2_f = w2 * s2[None, :]
    hw1_f = hw1 * hs1[None, :]
    hw2_f = hw2 * hs2[None, :]
    t0, t1, t2 = be0, be1, be2
    ht1 = hs1 * hb1 + hbe1
    ht2 = hs2 * hb2 + hbe2

    # Lane-dense conv3: zero-pad weight/bias from DOUT=37 to DOUT_PAD=128.
    hw3_pad = jnp.zeros((HIDDEN, DOUT_PAD), jnp.float32).at[:, :DOUT].set(hw3)
    hb3_pad = jnp.zeros((DOUT_PAD,), jnp.float32).at[:DOUT].set(hb3)

    # Kernel operands:
    #   * xyz weight zero-padded K=3 -> K=8 (rides the MXU as a tiny dot),
    #   * five square weight matrices stacked into one (5, H, H) bf16 operand,
    #   * six (128,) shift/bias rows packed into one (6, 128) f32 operand.
    w0x_pad = jnp.zeros((8, HIDDEN), jnp.float32).at[:3, :].set(w0x_f)
    wstack = jnp.stack([w1_f, w2_f, hw1_f, hw2_f, hw3_pad]).astype(jnp.bfloat16)
    shifts = jnp.stack([t0, t1, t2, ht1, ht2, hb3_pad]).astype(jnp.float32)

    return {
        'w0x': w0x_pad.astype(jnp.bfloat16),
        'w0f': w0f_f.astype(jnp.bfloat16),
        'wstack': wstack,
        'shifts': shifts,
    }


# ----------------------------------------------------------------------------
if __name__ == "__main__":
    key = jax.random.PRNGKey(0)
    kx, kf, kp = jax.random.split(key, 3)

    B, N = 2, 64
    xyz = jax.random.uniform(kx, (B, N, 3), jnp.float32)                  # votes (B,K,3)
    features = jax.random.normal(kf, (B, SEED_FEAT_DIM, N), jnp.float32)  # (B,C,K)
    params = init_params(kp)

    end_points = proposal_module_forward(xyz, features, params)
    end_points = jax.block_until_ready(end_points)

    assert end_points['objectness_scores'].shape == (B, NUM_PROPOSAL, 2)
    assert end_points['center'].shape == (B, NUM_PROPOSAL, 3)
    assert end_points['heading_scores'].shape == (B, NUM_PROPOSAL, NUM_HEADING_BIN)
    assert end_points['heading_residuals_normalized'].shape == (B, NUM_PROPOSAL, NUM_HEADING_BIN)
    assert end_points['size_scores'].shape == (B, NUM_PROPOSAL, NUM_SIZE_CLUSTER)
    assert end_points['size_residuals_normalized'].shape == (B, NUM_PROPOSAL, NUM_SIZE_CLUSTER, 3)
    assert end_points['sem_cls_scores'].shape == (B, NUM_PROPOSAL, NUM_CLASS)
    assert jnp.all(jnp.isfinite(end_points['center']))
    assert jnp.all(jnp.isfinite(end_points['sem_cls_scores']))

    print("KERNEL_OK")
</pallas_src>

<mosaic_0001>
module attributes {stable_mosaic.version = 11 : i64} {
  func.func @_fused_sa_head_kernel(%arg0: memref<512x8xbf16, #tpu.memory_space<vmem>>, %arg1: memref<512x256xbf16, #tpu.memory_space<vmem>>, %arg2: memref<8x128xbf16, #tpu.memory_space<vmem>>, %arg3: memref<256x128xbf16, #tpu.memory_space<vmem>>, %arg4: memref<5x128x128xbf16, #tpu.memory_space<vmem>>, %arg5: memref<6x128xf32, #tpu.memory_space<vmem>>, %arg6: memref<32x128xf32, #tpu.memory_space<vmem>>) attributes {dimension_semantics = [], scalar_prefetch = 0 : i64, scratch_operands = 0 : i64, tpu.core_type = #tpu.core_type<tc>} {
    %c0 = arith.constant 0 : index
    %c0_0 = arith.constant 0 : index
    %0 = vector.load %arg5[%c0, %c0_0] : memref<6x128xf32, #tpu.memory_space<vmem>>, vector<1x128xf32>
    %c1 = arith.constant 1 : index
    %c0_1 = arith.constant 0 : index
    %1 = vector.load %arg5[%c1, %c0_1] : memref<6x128xf32, #tpu.memory_space<vmem>>, vector<1x128xf32>
    %c2 = arith.constant 2 : index
    %c0_2 = arith.constant 0 : index
    %2 = vector.load %arg5[%c2, %c0_2] : memref<6x128xf32, #tpu.memory_space<vmem>>, vector<1x128xf32>
    %c3 = arith.constant 3 : index
    %c0_3 = arith.constant 0 : index
    %3 = vector.load %arg5[%c3, %c0_3] : memref<6x128xf32, #tpu.memory_space<vmem>>, vector<1x128xf32>
    %c4 = arith.constant 4 : index
    %c0_4 = arith.constant 0 : index
    %4 = vector.load %arg5[%c4, %c0_4] : memref<6x128xf32, #tpu.memory_space<vmem>>, vector<1x128xf32>
    %c5 = arith.constant 5 : index
    %c0_5 = arith.constant 0 : index
    %5 = vector.load %arg5[%c5, %c0_5] : memref<6x128xf32, #tpu.memory_space<vmem>>, vector<1x128xf32>
    %c0_6 = arith.constant 0 : index
    %c0_7 = arith.constant 0 : index
    %6 = vector.load %arg1[%c0_6, %c0_7] : memref<512x256xbf16, #tpu.memory_space<vmem>>, vector<512x256xbf16>
    %c0_8 = arith.constant 0 : index
    %c0_9 = arith.constant 0 : index
    %7 = vector.load %arg3[%c0_8, %c0_9] : memref<256x128xbf16, #tpu.memory_space<vmem>>, vector<256x128xbf16>
    %cst = arith.constant dense<0.000000e+00> : vector<512x128xf32>
    %8 = tpu.matmul %6, %7, %cst {dimension_numbers = #tpu.dot_dimension_numbers<[1], [0], [0], [1], [0, 0, 1, 1], [], []>} : vector<512x256xbf16>, vector<256x128xbf16>, vector<512x128xf32> -> vector<512x128xf32>
    %c0_10 = arith.constant 0 : index
    %c0_11 = arith.constant 0 : index
    %9 = vector.load %arg0[%c0_10, %c0_11] : memref<512x8xbf16, #tpu.memory_space<vmem>>, vector<512x8xbf16>
    %c0_12 = arith.constant 0 : index
    %c0_13 = arith.constant 0 : index
    %10 = vector.load %arg2[%c0_12, %c0_13] : memref<8x128xbf16, #tpu.memory_space<vmem>>, vector<8x128xbf16>
    %cst_14 = arith.constant dense<0.000000e+00> : vector<512x128xf32>
    %11 = tpu.matmul %9, %10, %cst_14 {dimension_numbers = #tpu.dot_dimension_numbers<[1], [0], [0], [1], [0, 0, 1, 1], [], []>} : vector<512x8xbf16>, vector<8x128xbf16>, vector<512x128xf32> -> vector<512x128xf32>
    %12 = arith.addf %8, %11 : vector<512x128xf32>
    %13 = vector.broadcast %0 : vector<1x128xf32> to vector<512x128xf32>
    %14 = arith.addf %12, %13 : vector<512x128xf32>
    %cst_15 = arith.constant 0.000000e+00 : f32
    %15 = vector.broadcast %cst_15 : f32 to vector<512x128xf32>
    %16 = arith.maximumf %14, %15 : vector<512x128xf32>
    %17 = arith.truncf %16 : vector<512x128xf32> to vector<512x128xbf16>
    %c0_16 = arith.constant 0 : index
    %c0_17 = arith.constant 0 : index
    %c0_18 = arith.constant 0 : index
    %18 = vector.load %arg4[%c0_16, %c0_17, %c0_18] : memref<5x128x128xbf16, #tpu.memory_space<vmem>>, vector<1x128x128xbf16>
    %19 = vector.shape_cast %18 : vector<1x128x128xbf16> to vector<128x128xbf16>
    %cst_19 = arith.constant dense<0.000000e+00> : vector<512x128xf32>
    %20 = tpu.matmul %17, %19, %cst_19 {dimension_numbers = #tpu.dot_dimension_numbers<[1], [0], [0], [1], [0, 0, 1, 1], [], []>} : vector<512x128xbf16>, vector<128x128xbf16>, vector<512x128xf32> -> vector<512x128xf32>
    %21 = vector.broadcast %1 : vector<1x128xf32> to vector<512x128xf32>
    %22 = arith.addf %20, %21 : vector<512x128xf32>
    %cst_20 = arith.constant 0.000000e+00 : f32
    %23 = vector.broadcast %cst_20 : f32 to vector<512x128xf32>
    %24 = arith.maximumf %22, %23 : vector<512x128xf32>
    %25 = arith.truncf %24 : vector<512x128xf32> to vector<512x128xbf16>
    %c1_21 = arith.constant 1 : index
    %c0_22 = arith.constant 0 : index
    %c0_23 = arith.constant 0 : index
    %26 = vector.load %arg4[%c1_21, %c0_22, %c0_23] : memref<5x128x128xbf16, #tpu.memory_space<vmem>>, vector<1x128x128xbf16>
    %27 = vector.shape_cast %26 : vector<1x128x128xbf16> to vector<128x128xbf16>
    %cst_24 = arith.constant dense<0.000000e+00> : vector<512x128xf32>
    %28 = tpu.matmul %25, %27, %cst_24 {dimension_numbers = #tpu.dot_dimension_numbers<[1], [0], [0], [1], [0, 0, 1, 1], [], []>} : vector<512x128xbf16>, vector<128x128xbf16>, vector<512x128xf32> -> vector<512x128xf32>
    %29 = vector.broadcast %2 : vector<1x128xf32> to vector<512x128xf32>
    %30 = arith.addf %28, %29 : vector<512x128xf32>
    %cst_25 = arith.constant 0.000000e+00 : f32
    %31 = vector.broadcast %cst_25 : f32 to vector<512x128xf32>
    %32 = arith.maximumf %30, %31 : vector<512x128xf32>
    %33 = vector.shape_cast %32 : vector<512x128xf32> to vector<32x16x128xf32>
    %cst_26 = arith.constant dense<0xFF800000> : vector<32x128xf32>
    %34 = vector.multi_reduction <maximumf>, %33, %cst_26 [1] : vector<32x16x128xf32> to vector<32x128xf32>
    %35 = arith.truncf %34 : vector<32x128xf32> to vector<32x128xbf16>
    %c2_27 = arith.constant 2 : index
    %c0_28 = arith.constant 0 : index
    %c0_29 = arith.constant 0 : index
    %36 = vector.load %arg4[%c2_27, %c0_28, %c0_29] : memref<5x128x128xbf16, #tpu.memory_space<vmem>>, vector<1x128x128xbf16>
    %37 = vector.shape_cast %36 : vector<1x128x128xbf16> to vector<128x128xbf16>
    %cst_30 = arith.constant dense<0.000000e+00> : vector<32x128xf32>
    %38 = tpu.matmul %35, %37, %cst_30 {dimension_numbers = #tpu.dot_dimension_numbers<[1], [0], [0], [1], [0, 0, 1, 1], [], []>} : vector<32x128xbf16>, vector<128x128xbf16>, vector<32x128xf32> -> vector<32x128xf32>
    %39 = vector.broadcast %3 : vector<1x128xf32> to vector<32x128xf32>
    %40 = arith.addf %38, %39 : vector<32x128xf32>
    %cst_31 = arith.constant 0.000000e+00 : f32
    %41 = vector.broadcast %cst_31 : f32 to vector<32x128xf32>
    %42 = arith.maximumf %40, %41 : vector<32x128xf32>
    %43 = arith.truncf %42 : vector<32x128xf32> to vector<32x128xbf16>
    %c3_32 = arith.constant 3 : index
    %c0_33 = arith.constant 0 : index
    %c0_34 = arith.constant 0 : index
    %44 = vector.load %arg4[%c3_32, %c0_33, %c0_34] : memref<5x128x128xbf16, #tpu.memory_space<vmem>>, vector<1x128x128xbf16>
    %45 = vector.shape_cast %44 : vector<1x128x128xbf16> to vector<128x128xbf16>
    %cst_35 = arith.constant dense<0.000000e+00> : vector<32x128xf32>
    %46 = tpu.matmul %43, %45, %cst_35 {dimension_numbers = #tpu.dot_dimension_numbers<[1], [0], [0], [1], [0, 0, 1, 1], [], []>} : vector<32x128xbf16>, vector<128x128xbf16>, vector<32x128xf32> -> vector<32x128xf32>
    %47 = vector.broadcast %4 : vector<1x128xf32> to vector<32x128xf32>
    %48 = arith.addf %46, %47 : vector<32x128xf32>
    %cst_36 = arith.constant 0.000000e+00 : f32
    %49 = vector.broadcast %cst_36 : f32 to vector<32x128xf32>
    %50 = arith.maximumf %48, %49 : vector<32x128xf32>
    %51 = arith.truncf %50 : vector<32x128xf32> to vector<32x128xbf16>
    %c4_37 = arith.constant 4 : index
    %c0_38 = arith.constant 0 : index
    %c0_39 = arith.constant 0 : index
    %52 = vector.load %arg4[%c4_37, %c0_38, %c0_39] : memref<5x128x128xbf16, #tpu.memory_space<vmem>>, vector<1x128x128xbf16>
    %53 = vector.shape_cast %52 : vector<1x128x128xbf16> to vector<128x128xbf16>
    %cst_40 = arith.constant dense<0.000000e+00> : vector<32x128xf32>
    %54 = tpu.matmul %51, %53, %cst_40 {dimension_numbers = #tpu.dot_dimension_numbers<[1], [0], [0], [1], [0, 0, 1, 1], [], []>} : vector<32x128xbf16>, vector<128x128xbf16>, vector<32x128xf32> -> vector<32x128xf32>
    %55 = vector.broadcast %5 : vector<1x128xf32> to vector<32x128xf32>
    %56 = arith.addf %54, %55 : vector<32x128xf32>
    %c0_41 = arith.constant 0 : index
    %c0_42 = arith.constant 0 : index
    %57 = vector.load %arg6[%c0_41, %c0_42] : memref<32x128xf32, #tpu.memory_space<vmem>>, vector<32x128xf32>
    tpu.vector_store %arg6[%c0_41, %c0_42], %56 {strides = array<i32>} : memref<32x128xf32, #tpu.memory_space<vmem>>, vector<32x128xf32>,
    return
  }
}

</mosaic_0001>

<llo_original>
// kernel: custom-call.10
$region0: #{custom-call.10}
  %s0 = inlined_call_operand.vmem [shape: f32[2,64], index: 0, kind: output, shape index: {}]

// kernel: proposal_module_forward.1
$region0: #{proposal_module_forward.1}
  #allocation0 [shape = 'u32[]', space=smem, size = 0x4, offset = 0x4, fixed_abs, tag = 'smem constant byte address 0x4 - core index']
  #allocation1 [shape = 'u32[144,128]{1,0:T(1,128)}', space=vmem, size = 0x12000, scoped, tag = 'internal scratch']
  %s0 = inlined_call_operand.vmem [shape: bf16[512,8], index: 0, kind: input, shape index: {}]
  %s1 = inlined_call_operand.vmem [shape: bf16[512,256], index: 1, kind: input, shape index: {}]
  %s2 = inlined_call_operand.vmem [shape: bf16[8,128], index: 2, kind: input, shape index: {}]
  %s3 = inlined_call_operand.vmem [shape: bf16[256,128], index: 3, kind: input, shape index: {}]
  %s4 = inlined_call_operand.vmem [shape: bf16[5,128,128], index: 4, kind: input, shape index: {}]
  %s5 = inlined_call_operand.vmem [shape: f32[6,128], index: 5, kind: input, shape index: {}]
  %s6 = inlined_call_operand.vmem [shape: f32[32,128], index: 6, kind: output, shape index: {}]
  %s7 = sld [smem:[#allocation0]]
  $region34: #{proposal_module_forward.1} parent=0
    _
  %s9 = ssub.s32 1, %s7
  %s10 = scalar_select 0, %s9, %s7
  // Predicated region
  $region2: #{proposal_module_forward.1} parent=0 // pred_check
    _
  $region3: #{proposal_module_forward.1} parent=0 // pred_check_branch
    %12 = sbr.rel (0) target = $region5
  $region4: #{proposal_module_forward.1} parent=0 // pred_region
    _
  $region5: #{proposal_module_forward.1} parent=0 // pred_fallthru
    _
  // Predicated region
  $region6: #{proposal_module_forward.1} parent=0 // pred_check
    _
  $region7: #{proposal_module_forward.1} parent=0 // pred_check_branch
    %14 = sbr.rel (0) target = $region9
  $region8: #{proposal_module_forward.1} parent=0 // pred_region
    _
  $region9: #{proposal_module_forward.1} parent=0 // pred_fallthru
    _
  // Predicated region
  $region10: #{proposal_module_forward.1} parent=0 // pred_check
    _
  $region11: #{proposal_module_forward.1} parent=0 // pred_check_branch
    %16 = sbr.rel (0) target = $region13
  $region12: #{proposal_module_forward.1} parent=0 // pred_region
    _
  $region13: #{proposal_module_forward.1} parent=0 // pred_fallthru
    _
  // Predicated region
  $region14: #{proposal_module_forward.1} parent=0 // pred_check
    _
  $region15: #{proposal_module_forward.1} parent=0 // pred_check_branch
    %18 = sbr.rel (0) target = $region17
  $region16: #{proposal_module_forward.1} parent=0 // pred_region
    _
  $region17: #{proposal_module_forward.1} parent=0 // pred_fallthru
    _
  // Predicated region
  $region18: #{proposal_module_forward.1} parent=0 // pred_check
    _
  $region19: #{proposal_module_forward.1} parent=0 // pred_check_branch
    %20 = sbr.rel (0) target = $region21
  $region20: #{proposal_module_forward.1} parent=0 // pred_region
    _
  $region21: #{proposal_module_forward.1} parent=0 // pred_fallthru
    _
  // Predicated region
  $region22: #{proposal_module_forward.1} parent=0 // pred_check
    _
  $region23: #{proposal_module_forward.1} parent=0 // pred_check_branch
    %22 = sbr.rel (0) target = $region25
  $region24: #{proposal_module_forward.1} parent=0 // pred_region
    _
  $region25: #{proposal_module_forward.1} parent=0 // pred_fallthru
    _
  %v24 = vld [vmem:[%s5] sm:$0x1]
  %v25 = vld [vmem:[%s5 + $0x1] sm:$0x1]
  %v26 = vld [vmem:[%s5 + $0x2] sm:$0x1]
  %v27 = vld [vmem:[%s5 + $0x3] sm:$0x1]
  %v28 = vld [vmem:[%s5 + $0x4] sm:$0x1]
  %v29 = vld [vmem:[%s5 + $0x5] sm:$0x1]
  %v30 = vld [vmem:[%s1] sm:$0xff]
  %v31 = vld [vmem:[%s1 + $0x8] sm:$0xff]
  %v32 = vld [vmem:[%s1 + $0x10] sm:$0xff]
  %v33 = vld [vmem:[%s1 + $0x18] sm:$0xff]
  %v34 = vld [vmem:[%s1 + $0x20] sm:$0xff]
  %v35 = vld [vmem:[%s1 + $0x28] sm:$0xff]
  %v36 = vld [vmem:[%s1 + $0x30] sm:$0xff]
  %v37 = vld [vmem:[%s1 + $0x38] sm:$0xff]
  %v38 = vld [vmem:[%s1 + $0x40] sm:$0xff]
  %v39 = vld [vmem:[%s1 + $0x48] sm:$0xff]
  %v40 = vld [vmem:[%s1 + $0x50] sm:$0xff]
  %v41 = vld [vmem:[%s1 + $0x58] sm:$0xff]
  %v42 = vld [vmem:[%s1 + $0x60] sm:$0xff]
  %v43 = vld [vmem:[%s1 + $0x68] sm:$0xff]
  %v44 = vld [vmem:[%s1 + $0x70] sm:$0xff]
  %v45 = vld [vmem:[%s1 + $0x78] sm:$0xff]
  %v46 = vld [vmem:[%s1 + $0x80] sm:$0xff]
  %v47 = vld [vmem:[%s1 + $0x88] sm:$0xff]
  %v48 = vld [vmem:[%s1 + $0x90] sm:$0xff]
  %v49 = vld [vmem:[%s1 + $0x98] sm:$0xff]
  %v50 = vld [vmem:[%s1 + $0xa0] sm:$0xff]
  %v51 = vld [vmem:[%s1 + $0xa8] sm:$0xff]
  %v52 = vld [vmem:[%s1 + $0xb0] sm:$0xff]
  %v53 = vld [vmem:[%s1 + $0xb8] sm:$0xff]
  %v54 = vld [vmem:[%s1 + $0xc0] sm:$0xff]
  %v55 = vld [vmem:[%s1 + $0xc8] sm:$0xff]
  %v56 = vld [vmem:[%s1 + $0xd0] sm:$0xff]
  %v57 = vld [vmem:[%s1 + $0xd8] sm:$0xff]
  %v58 = vld [vmem:[%s1 + $0xe0] sm:$0xff]
  %v59 = vld [vmem:[%s1 + $0xe8] sm:$0xff]
  %v60 = vld [vmem:[%s1 + $0xf0] sm:$0xff]
  %v61 = vld [vmem:[%s1 + $0xf8] sm:$0xff]
  %v62 = vld [vmem:[%s1 + $0x100] sm:$0xff]
  %v63 = vld [vmem:[%s1 + $0x108] sm:$0xff]
  %v64 = vld [vmem:[%s1 + $0x110] sm:$0xff]
  %v65 = vld [vmem:[%s1 + $0x118] sm:$0xff]
  %v66 = vld [vmem:[%s1 + $0x120] sm:$0xff]
  %v67 = vld [vmem:[%s1 + $0x128] sm:$0xff]
  %v68 = vld [vmem:[%s1 + $0x130] sm:$0xff]
  %v69 = vld [vmem:[%s1 + $0x138] sm:$0xff]
  %v70 = vld [vmem:[%s1 + $0x140] sm:$0xff]
  %v71 = vld [vmem:[%s1 + $0x148] sm:$0xff]
  %v72 = vld [vmem:[%s1 + $0x150] sm:$0xff]
  %v73 = vld [vmem:[%s1 + $0x158] sm:$0xff]
  %v74 = vld [vmem:[%s1 + $0x160] sm:$0xff]
  %v75 = vld [vmem:[%s1 + $0x168] sm:$0xff]
  %v76 = vld [vmem:[%s1 + $0x170] sm:$0xff]
  %v77 = vld [vmem:[%s1 + $0x178] sm:$0xff]
  %v78 = vld [vmem:[%s1 + $0x180] sm:$0xff]
  %v79 = vld [vmem:[%s1 + $0x188] sm:$0xff]
  %v80 = vld [vmem:[%s1 + $0x190] sm:$0xff]
  %v81 = vld [vmem:[%s1 + $0x198] sm:$0xff]
  %v82 = vld [vmem:[%s1 + $0x1a0] sm:$0xff]
  %v83 = vld [vmem:[%s1 + $0x1a8] sm:$0xff]
  %v84 = vld [vmem:[%s1 + $0x1b0] sm:$0xff]
  %v85 = vld [vmem:[%s1 + $0x1b8] sm:$0xff]
  %v86 = vld [vmem:[%s1 + $0x1c0] sm:$0xff]
  %v87 = vld [vmem:[%s1 + $0x1c8] sm:$0xff]
  %v88 = vld [vmem:[%s1 + $0x1d0] sm:$0xff]
  %v89 = vld [vmem:[%s1 + $0x1d8] sm:$0xff]
  %v90 = vld [vmem:[%s1 + $0x1e0] sm:$0xff]
  %v91 = vld [vmem:[%s1 + $0x1e8] sm:$0xff]
  %v92 = vld [vmem:[%s1 + $0x1f0] sm:$0xff]
  %v93 = vld [vmem:[%s1 + $0x1f8] sm:$0xff]
  %v94 = vld [vmem:[%s3] sm:$0xf]
  %v95 = vld [vmem:[%s3 + $0x4] sm:$0xf]
  %v96 = vld [vmem:[%s3 + $0x8] sm:$0xf]
  %v97 = vld [vmem:[%s3 + $0xc] sm:$0xf]
  %v98 = vld [vmem:[%s3 + $0x10] sm:$0xf]
  %v99 = vld [vmem:[%s3 + $0x14] sm:$0xf]
  %v100 = vld [vmem:[%s3 + $0x18] sm:$0xf]
  %v101 = vld [vmem:[%s3 + $0x1c] sm:$0xf]
  %v102 = vld [vmem:[%s3 + $0x20] sm:$0xf]
  %v103 = vld [vmem:[%s3 + $0x24] sm:$0xf]
  %v104 = vld [vmem:[%s3 + $0x28] sm:$0xf]
  %v105 = vld [vmem:[%s3 + $0x2c] sm:$0xf]
  %v106 = vld [vmem:[%s3 + $0x30] sm:$0xf]
  %v107 = vld [vmem:[%s3 + $0x34] sm:$0xf]
  %v108 = vld [vmem:[%s3 + $0x38] sm:$0xf]
  %v109 = vld [vmem:[%s3 + $0x3c] sm:$0xf]
  %v110 = vld [vmem:[%s3 + $0x40] sm:$0xf]
  %v111 = vld [vmem:[%s3 + $0x44] sm:$0xf]
  %v112 = vld [vmem:[%s3 + $0x48] sm:$0xf]
  %v113 = vld [vmem:[%s3 + $0x4c] sm:$0xf]
  %v114 = vld [vmem:[%s3 + $0x50] sm:$0xf]
  %v115 = vld [vmem:[%s3 + $0x54] sm:$0xf]
  %v116 = vld [vmem:[%s3 + $0x58] sm:$0xf]
  %v117 = vld [vmem:[%s3 + $0x5c] sm:$0xf]
  %v118 = vld [vmem:[%s3 + $0x60] sm:$0xf]
  %v119 = vld [vmem:[%s3 + $0x64] sm:$0xf]
  %v120 = vld [vmem:[%s3 + $0x68] sm:$0xf]
  %v121 = vld [vmem:[%s3 + $0x6c] sm:$0xf]
  %v122 = vld [vmem:[%s3 + $0x70] sm:$0xf]
  %v123 = vld [vmem:[%s3 + $0x74] sm:$0xf]
  %v124 = vld [vmem:[%s3 + $0x78] sm:$0xf]
  %v125 = vld [vmem:[%s3 + $0x7c] sm:$0xf]
  %v126 = vld [vmem:[%s0] sm:$0xf]
  %v127 = vld [vmem:[%s0 + $0x4] sm:$0xf]
  %v128 = vld [vmem:[%s0 + $0x8] sm:$0xf]
  %v129 = vld [vmem:[%s0 + $0xc] sm:$0xf]
  %v130 = vld [vmem:[%s0 + $0x10] sm:$0xf]
  %v131 = vld [vmem:[%s0 + $0x14] sm:$0xf]
  %v132 = vld [vmem:[%s0 + $0x18] sm:$0xf]
  %v133 = vld [vmem:[%s0 + $0x1c] sm:$0xf]
  %v134 = vld [vmem:[%s0 + $0x20] sm:$0xf]
  %v135 = vld [vmem:[%s0 + $0x24] sm:$0xf]
  %v136 = vld [vmem:[%s0 + $0x28] sm:$0xf]
  %v137 = vld [vmem:[%s0 + $0x2c] sm:$0xf]
  %v138 = vld [vmem:[%s0 + $0x30] sm:$0xf]
  %v139 = vld [vmem:[%s0 + $0x34] sm:$0xf]
  %v140 = vld [vmem:[%s0 + $0x38] sm:$0xf]
  %v141 = vld [vmem:[%s0 + $0x3c] sm:$0xf]
  %v142 = vld [vmem:[%s0 + $0x40] sm:$0xf]
  %v143 = vld [vmem:[%s0 + $0x44] sm:$0xf]
  %v144 = vld [vmem:[%s0 + $0x48] sm:$0xf]
  %v145 = vld [vmem:[%s0 + $0x4c] sm:$0xf]
  %v146 = vld [vmem:[%s0 + $0x50] sm:$0xf]
  %v147 = vld [vmem:[%s0 + $0x54] sm:$0xf]
  %v148 = vld [vmem:[%s0 + $0x58] sm:$0xf]
  %v149 = vld [vmem:[%s0 + $0x5c] sm:$0xf]
  %v150 = vld [vmem:[%s0 + $0x60] sm:$0xf]
  %v151 = vld [vmem:[%s0 + $0x64] sm:$0xf]
  %v152 = vld [vmem:[%s0 + $0x68] sm:$0xf]
  %v153 = vld [vmem:[%s0 + $0x6c] sm:$0xf]
  %v154 = vld [vmem:[%s0 + $0x70] sm:$0xf]
  %v155 = vld [vmem:[%s0 + $0x74] sm:$0xf]
  %v156 = vld [vmem:[%s0 + $0x78] sm:$0xf]
  %v157 = vld [vmem:[%s0 + $0x7c] sm:$0xf]
  %v158 = vld [vmem:[%s0 + $0x80] sm:$0xf]
  %v159 = vld [vmem:[%s0 + $0x84] sm:$0xf]
  %v160 = vld [vmem:[%s0 + $0x88] sm:$0xf]
  %v161 = vld [vmem:[%s0 + $0x8c] sm:$0xf]
  %v162 = vld [vmem:[%s0 + $0x90] sm:$0xf]
  %v163 = vld [vmem:[%s0 + $0x94] sm:$0xf]
  %v164 = vld [vmem:[%s0 + $0x98] sm:$0xf]
  %v165 = vld [vmem:[%s0 + $0x9c] sm:$0xf]
  %v166 = vld [vmem:[%s0 + $0xa0] sm:$0xf]
  %v167 = vld [vmem:[%s0 + $0xa4] sm:$0xf]
  %v168 = vld [vmem:[%s0 + $0xa8] sm:$0xf]
  %v169 = vld [vmem:[%s0 + $0xac] sm:$0xf]
  %v170 = vld [vmem:[%s0 + $0xb0] sm:$0xf]
  %v171 = vld [vmem:[%s0 + $0xb4] sm:$0xf]
  %v172 = vld [vmem:[%s0 + $0xb8] sm:$0xf]
  %v173 = vld [vmem:[%s0 + $0xbc] sm:$0xf]
  %v174 = vld [vmem:[%s0 + $0xc0] sm:$0xf]
  %v175 = vld [vmem:[%s0 + $0xc4] sm:$0xf]
  %v176 = vld [vmem:[%s0 + $0xc8] sm:$0xf]
  %v177 = vld [vmem:[%s0 + $0xcc] sm:$0xf]
  %v178 = vld [vmem:[%s0 + $0xd0] sm:$0xf]
  %v179 = vld [vmem:[%s0 + $0xd4] sm:$0xf]
  %v180 = vld [vmem:[%s0 + $0xd8] sm:$0xf]
  %v181 = vld [vmem:[%s0 + $0xdc] sm:$0xf]
  %v182 = vld [vmem:[%s0 + $0xe0] sm:$0xf]
  %v183 = vld [vmem:[%s0 + $0xe4] sm:$0xf]
  %v184 = vld [vmem:[%s0 + $0xe8] sm:$0xf]
  %v185 = vld [vmem:[%s0 + $0xec] sm:$0xf]
  %v186 = vld [vmem:[%s0 + $0xf0] sm:$0xf]
  %v187 = vld [vmem:[%s0 + $0xf4] sm:$0xf]
  %v188 = vld [vmem:[%s0 + $0xf8] sm:$0xf]
  %v189 = vld [vmem:[%s0 + $0xfc] sm:$0xf]
  %v190 = vld [vmem:[%s2] sm:$0xf]
  %v255 = vunpack.c.l.b16 %v126
  %v256 = vunpack.c.l.b16 %v127
  %v257 = vunpack.c.l.b16 %v128
  %v258 = vunpack.c.l.b16 %v129
  %v259 = vunpack.c.l.b16 %v130
  %v260 = vunpack.c.l.b16 %v131
  %v261 = vunpack.c.l.b16 %v132
  %v262 = vunpack.c.l.b16 %v133
  %v263 = vunpack.c.l.b16 %v134
  %v264 = vunpack.c.l.b16 %v135
  %v265 = vunpack.c.l.b16 %v136
  %v266 = vunpack.c.l.b16 %v137
  %v267 = vunpack.c.l.b16 %v138
  %v268 = vunpack.c.l.b16 %v139
  %v269 = vunpack.c.l.b16 %v140
  %v270 = vunpack.c.l.b16 %v141
  %v271 = vunpack.c.l.b16 %v142
  %v272 = vunpack.c.l.b16 %v143
  %v273 = vunpack.c.l.b16 %v144
  %v274 = vunpack.c.l.b16 %v145
  %v275 = vunpack.c.l.b16 %v146
  %v276 = vunpack.c.l.b16 %v147
  %v277 = vunpack.c.l.b16 %v148
  %v278 = vunpack.c.l.b16 %v149
  %v279 = vunpack.c.l.b16 %v150
  %v280 = vunpack.c.l.b16 %v151
  %v281 = vunpack.c.l.b16 %v152
  %v282 = vunpack.c.l.b16 %v153
  %v283 = vunpack.c.l.b16 %v154
  %v284 = vunpack.c.l.b16 %v155
  %v285 = vunpack.c.l.b16 %v156
  %v286 = vunpack.c.l.b16 %v157
  %v287 = vunpack.c.l.b16 %v158
  %v288 = vunpack.c.l.b16 %v159
  %v289 = vunpack.c.l.b16 %v160
  %v290 = vunpack.c.l.b16 %v161
  %v291 = vunpack.c.l.b16 %v162
  %v292 = vunpack.c.l.b16 %v163
  %v293 = vunpack.c.l.b16 %v164
  %v294 = vunpack.c.l.b16 %v165
  %v295 = vunpack.c.l.b16 %v166
  %v296 = vunpack.c.l.b16 %v167
  %v297 = vunpack.c.l.b16 %v168
  %v298 = vunpack.c.l.b16 %v169
  %v299 = vunpack.c.l.b16 %v170
  %v300 = vunpack.c.l.b16 %v171
  %v301 = vunpack.c.l.b16 %v172
  %v302 = vunpack.c.l.b16 %v173
  %v303 = vunpack.c.l.b16 %v174
  %v304 = vunpack.c.l.b16 %v175
  %v305 = vunpack.c.l.b16 %v176
  %v306 = vunpack.c.l.b16 %v177
  %v307 = vunpack.c.l.b16 %v178
  %v308 = vunpack.c.l.b16 %v179
  %v309 = vunpack.c.l.b16 %v180
  %v310 = vunpack.c.l.b16 %v181
  %v311 = vunpack.c.l.b16 %v182
  %v312 = vunpack.c.l.b16 %v183
  %v313 = vunpack.c.l.b16 %v184
  %v314 = vunpack.c.l.b16 %v185
  %v315 = vunpack.c.l.b16 %v186
  %v316 = vunpack.c.l.b16 %v187
  %v317 = vunpack.c.l.b16 %v188
  %v318 = vunpack.c.l.b16 %v189
  %v319 = vpack.c.b16 %v256, %v255
  %v320 = vpack.c.b16 %v258, %v257
  %v321 = vpack.c.b16 %v260, %v259
  %v322 = vpack.c.b16 %v262, %v261
  %v323 = vpack.c.b16 %v264, %v263
  %v324 = vpack.c.b16 %v266, %v265
  %v325 = vpack.c.b16 %v268, %v267
  %v326 = vpack.c.b16 %v270, %v269
  %v327 = vpack.c.b16 %v272, %v271
  %v328 = vpack.c.b16 %v274, %v273
  %v329 = vpack.c.b16 %v276, %v275
  %v330 = vpack.c.b16 %v278, %v277
  %v331 = vpack.c.b16 %v280, %v279
  %v332 = vpack.c.b16 %v282, %v281
  %v333 = vpack.c.b16 %v284, %v283
  %v334 = vpack.c.b16 %v286, %v285
  %v335 = vpack.c.b16 %v288, %v287
  %v336 = vpack.c.b16 %v290, %v289
  %v337 = vpack.c.b16 %v292, %v291
  %v338 = vpack.c.b16 %v294, %v293
  %v339 = vpack.c.b16 %v296, %v295
  %v340 = vpack.c.b16 %v298, %v297
  %v341 = vpack.c.b16 %v300, %v299
  %v342 = vpack.c.b16 %v302, %v301
  %v343 = vpack.c.b16 %v304, %v303
  %v344 = vpack.c.b16 %v306, %v305
  %v345 = vpack.c.b16 %v308, %v307
  %v346 = vpack.c.b16 %v310, %v309
  %v347 = vpack.c.b16 %v312, %v311
  %v348 = vpack.c.b16 %v314, %v313
  %v349 = vpack.c.b16 %v316, %v315
  %v350 = vpack.c.b16 %v318, %v317
  %vm351 = vcmask 64512
  %v353 = vsel %vm351, %v319, 0
  %v356 = vsel %vm351, %v320, 0
  %v359 = vsel %vm351, %v321, 0
  %v362 = vsel %vm351, %v322, 0
  %v365 = vsel %vm351, %v323, 0
  %v368 = vsel %vm351, %v324, 0
  %v371 = vsel %vm351, %v325, 0
  %v374 = vsel %vm351, %v326, 0
  %v377 = vsel %vm351, %v327, 0
  %v380 = vsel %vm351, %v328, 0
  %v383 = vsel %vm351, %v329, 0
  %v386 = vsel %vm351, %v330, 0
  %v389 = vsel %vm351, %v331, 0
  %v392 = vsel %vm351, %v332, 0
  %v395 = vsel %vm351, %v333, 0
  %v398 = vsel %vm351, %v334, 0
  %v401 = vsel %vm351, %v335, 0
  %v404 = vsel %vm351, %v336, 0
  %v407 = vsel %vm351, %v337, 0
  %v410 = vsel %vm351, %v338, 0
  %v413 = vsel %vm351, %v339, 0
  %v416 = vsel %vm351, %v340, 0
  %v419 = vsel %vm351, %v341, 0
  %v422 = vsel %vm351, %v342, 0
  %v425 = vsel %vm351, %v343, 0
  %v428 = vsel %vm351, %v344, 0
  %v431 = vsel %vm351, %v345, 0
  %v434 = vsel %vm351, %v346, 0
  %v437 = vsel %vm351, %v347, 0
  %v440 = vsel %vm351, %v348, 0
  %v443 = vsel %vm351, %v349, 0
  %v446 = vsel %vm351, %v350, 0
  %vm448 = vcmask 1043456
  %v450 = vsel %vm448, %v190, 0
  %452 = vmatprep.subr.bf16.mxu0 0
  %453 = vmatpush1.bf16.msra.mxu0 %v450
  %454 = vmatprep.subr.bf16.mxu0 0
  %455 = vmatpush1.bf16.msra.mxu0 0
  %456 = vmatprep.subr.bf16.mxu0 0
  %457 = vmatpush1.bf16.msra.mxu0 0
  %458 = vmatprep.subr.bf16.mxu0 0
  %459 = vmatpush1.bf16.msra.mxu0 0
  %460 = vmatprep.subr.bf16.mxu0 0
  %461 = vmatpush1.bf16.msra.mxu0 0
  %462 = vmatprep.subr.bf16.mxu0 0
  %463 = vmatpush1.bf16.msra.mxu0 0
  %464 = vmatprep.subr.bf16.mxu0 0
  %465 = vmatpush1.bf16.msra.mxu0 0
  %466 = vmatprep.subr.bf16.mxu0 0
  %467 = vmatpush1.bf16.msra.mxu0 0
  %468 = vmatprep.subr.bf16.mxu0 0
  %469 = vmatpush1.bf16.msra.mxu0 0
  %470 = vmatprep.subr.bf16.mxu0 0
  %471 = vmatpush1.bf16.msra.mxu0 0
  %472 = vmatprep.subr.bf16.mxu0 0
  %473 = vmatpush1.bf16.msra.mxu0 0
  %474 = vmatprep.subr.bf16.mxu0 0
  %475 = vmatpush1.bf16.msra.mxu0 0
  %476 = vmatprep.subr.bf16.mxu0 0
  %477 = vmatpush1.bf16.msra.mxu0 0
  %478 = vmatprep.subr.bf16.mxu0 0
  %479 = vmatpush1.bf16.msra.mxu0 0
  %480 = vmatprep.subr.bf16.mxu0 0
  %481 = vmatpush1.bf16.msra.mxu0 0
  %482 = vmatprep.subr.bf16.mxu0 0
  %483 = vmatpush1.bf16.msra.mxu0 0
  %484 = vmatprep.mubr.bf16.mxu0 0
  %485 = vmatmul.mubr.bf16.gmra.mrb[0].mxu0 %v353
  %v486 = vpop.f32.mrb[0].mxu0
  %v487 = vadd.f32 0.0, %v486
  %v488 = vpop.f32.mrb[0].mxu0
  %v489 = vpop.f32.mrb[0].mxu0
  %v490 = vadd.f32 0.0, %v489
  %v491 = vpop.f32.mrb[0].mxu0
  %492 = vmatprep.mubr.bf16.mxu0 0
  %493 = vmatmul.mubr.bf16.gmra.mrb[0].mxu0 %v356
  %v494 = vpop.f32.mrb[0].mxu0
  %v495 = vadd.f32 0.0, %v494
  %v496 = vpop.f32.mrb[0].mxu0
  %v497 = vpop.f32.mrb[0].mxu0
  %v498 = vadd.f32 0.0, %v497
  %v499 = vpop.f32.mrb[0].mxu0
  %500 = vmatprep.mubr.bf16.mxu0 0
  %501 = vmatmul.mubr.bf16.gmra.mrb[0].mxu0 %v359
  %v502 = vpop.f32.mrb[0].mxu0
  %v503 = vadd.f32 0.0, %v502
  %v504 = vpop.f32.mrb[0].mxu0
  %v505 = vpop.f32.mrb[0].mxu0
  %v506 = vadd.f32 0.0, %v505
  %v507 = vpop.f32.mrb[0].mxu0
  %508 = vmatprep.mubr.bf16.mxu0 0
  %509 = vmatmul.mubr.bf16.gmra.mrb[0].mxu0 %v362
  %v510 = vpop.f32.mrb[0].mxu0
  %v511 = vadd.f32 0.0, %v510
  %v512 = vpop.f32.mrb[0].mxu0
  %v513 = vpop.f32.mrb[0].mxu0
  %v514 = vadd.f32 0.0, %v513
  %v515 = vpop.f32.mrb[0].mxu0
  %516 = vmatprep.mubr.bf16.mxu0 0
  %517 = vmatmul.mubr.bf16.gmra.mrb[0].mxu0 %v365
  %v518 = vpop.f32.mrb[0].mxu0
  %v519 = vadd.f32 0.0, %v518
  %v520 = vpop.f32.mrb[0].mxu0
  %v521 = vpop.f32.mrb[0].mxu0
  %v522 = vadd.f32 0.0, %v521
  %v523 = vpop.f32.mrb[0].mxu0
  %524 = vmatprep.mubr.bf16.mxu0 0
  %525 = vmatmul.mubr.bf16.gmra.mrb[0].mxu0 %v368
  %v526 = vpop.f32.mrb[0].mxu0
  %v527 = vadd.f32 0.0, %v526
  %v528 = vpop.f32.mrb[0].mxu0
  %v529 = vpop.f32.mrb[0].mxu0
  %v530 = vadd.f32 0.0, %v529
  %v531 = vpop.f32.mrb[0].mxu0
  %532 = vmatprep.mubr.bf16.mxu0 0
  %533 = vmatmul.mubr.bf16.gmra.mrb[0].mxu0 %v371
  %v534 = vpop.f32.mrb[0].mxu0
  %v535 = vadd.f32 0.0, %v534
  %v536 = vpop.f32.mrb[0].mxu0
  %v537 = vpop.f32.mrb[0].mxu0
  %v538 = vadd.f32 0.0, %v537
  %v539 = vpop.f32.mrb[0].mxu0
  %540 = vmatprep.mubr.bf16.mxu0 0
  %541 = vmatmul.mubr.bf16.gmra.mrb[0].mxu0 %v374
  %v542 = vpop.f32.mrb[0].mxu0
  %v543 = vadd.f32 0.0, %v542
  %v544 = vpop.f32.mrb[0].mxu0
  %v545 = vpop.f32.mrb[0].mxu0
  %v546 = vadd.f32 0.0, %v545
  %v547 = vpop.f32.mrb[0].mxu0
  %548 = vmatprep.mubr.bf16.mxu0 0
  %549 = vmatmul.mubr.bf16.gmra.mrb[0].mxu0 %v377
  %v550 = vpop.f32.mrb[0].mxu0
  %v551 = vadd.f32 0.0, %v550
  %v552 = vpop.f32.mrb[0].mxu0
  %v553 = vpop.f32.mrb[0].mxu0
  %v554 = vadd.f32 0.0, %v553
  %v555 = vpop.f32.mrb[0].mxu0
  %556 = vmatprep.mubr.bf16.mxu0 0
  %557 = vmatmul.mubr.bf16.gmra.mrb[0].mxu0 %v380
  %v558 = vpop.f32.mrb[0].mxu0
  %v559 = vadd.f32 0.0, %v558
  %v560 = vpop.f32.mrb[0].mxu0
  %v561 = vpop.f32.mrb[0].mxu0
  %v562 = vadd.f32 0.0, %v561
  %v563 = vpop.f32.mrb[0].mxu0
  %564 = vmatprep.mubr.bf16.mxu0 0
  %565 = vmatmul.mubr.bf16.gmra.mrb[0].mxu0 %v383
  %v566 = vpop.f32.mrb[0].mxu0
  %v567 = vadd.f32 0.0, %v566
  %v568 = vpop.f32.mrb[0].mxu0
  %v569 = vpop.f32.mrb[0].mxu0
  %v570 = vadd.f32 0.0, %v569
  %v571 = vpop.f32.mrb[0].mxu0
  %572 = vmatprep.mubr.bf16.mxu0 0
  %573 = vmatmul.mubr.bf16.gmra.mrb[0].mxu0 %v386
  %v574 = vpop.f32.mrb[0].mxu0
  %v575 = vadd.f32 0.0, %v574
  %v576 = vpop.f32.mrb[0].mxu0
  %v577 = vpop.f32.mrb[0].mxu0
  %v578 = vadd.f32 0.0, %v577
  %v579 = vpop.f32.mrb[0].mxu0
  %580 = vmatprep.mubr.bf16.mxu0 0
  %581 = vmatmul.mubr.bf16.gmra.mrb[0].mxu0 %v389
  %v582 = vpop.f32.mrb[0].mxu0
  %v583 = vadd.f32 0.0, %v582
  %v584 = vpop.f32.mrb[0].mxu0
  %v585 = vpop.f32.mrb[0].mxu0
  %v586 = vadd.f32 0.0, %v585
  %v587 = vpop.f32.mrb[0].mxu0
  %588 = vmatprep.mubr.bf16.mxu0 0
  %589 = vmatmul.mubr.bf16.gmra.mrb[0].mxu0 %v392
  %v590 = vpop.f32.mrb[0].mxu0
  %v591 = vadd.f32 0.0, %v590
  %v592 = vpop.f32.mrb[0].mxu0
  %v593 = vpop.f32.mrb[0].mxu0
  %v594 = vadd.f32 0.0, %v593
  %v595 = vpop.f32.mrb[0].mxu0
  %596 = vmatprep.mubr.bf16.mxu0 0
  %597 = vmatmul.mubr.bf16.gmra.mrb[0].mxu0 %v395
  %v598 = vpop.f32.mrb[0].mxu0
  %v599 = vadd.f32 0.0, %v598
  %v600 = vpop.f32.mrb[0].mxu0
  %v601 = vpop.f32.mrb[0].mxu0
  %v602 = vadd.f32 0.0, %v601
  %v603 = vpop.f32.mrb[0].mxu0
  %604 = vmatprep.mubr.bf16.mxu0 0
  %605 = vmatmul.mubr.bf16.gmra.mrb[0].mxu0 %v398
  %v606 = vpop.f32.mrb[0].mxu0
  %v607 = vadd.f32 0.0, %v606
  %v608 = vpop.f32.mrb[0].mxu0
  %v609 = vpop.f32.mrb[0].mxu0
  %v610 = vadd.f32 0.0, %v609
  %v611 = vpop.f32.mrb[0].mxu0
  %612 = vmatprep.mubr.bf16.mxu0 0
  %613 = vmatmul.mubr.bf16.gmra.mrb[0].mxu0 %v401
  %v614 = vpop.f32.mrb[0].mxu0
  %v615 = vadd.f32 0.0, %v614
  %v616 = vpop.f32.mrb[0].mxu0
  %v617 = vpop.f32.mrb[0].mxu0
  %v618 = vadd.f32 0.0, %v617
  %v619 = vpop.f32.mrb[0].mxu0
  %620 = vmatprep.mubr.bf16.mxu0 0
  %621 = vmatmul.mubr.bf16.gmra.mrb[0].mxu0 %v404
  %v622 = vpop.f32.mrb[0].mxu0
  %v623 = vadd.f32 0.0, %v622
  %v624 = vpop.f32.mrb[0].mxu0
  %v625 = vpop.f32.mrb[0].mxu0
  %v626 = vadd.f32 0.0, %v625
  %v627 = vpop.f32.mrb[0].mxu0
  %628 = vmatprep.mubr.bf16.mxu0 0
  %629 = vmatmul.mubr.bf16.gmra.mrb[0].mxu0 %v407
  %v630 = vpop.f32.mrb[0].mxu0
  %v631 = vadd.f32 0.0, %v630
  %v632 = vpop.f32.mrb[0].mxu0
  %v633 = vpop.f32.mrb[0].mxu0
  %v634 = vadd.f32 0.0, %v633
  %v635 = vpop.f32.mrb[0].mxu0
  %636 = vmatprep.mubr.bf16.mxu0 0
  %637 = vmatmul.mubr.bf16.gmra.mrb[0].mxu0 %v410
  %v638 = vpop.f32.mrb[0].mxu0
  %v639 = vadd.f32 0.0, %v638
  %v640 = vpop.f32.mrb[0].mxu0
  %v641 = vpop.f32.mrb[0].mxu0
  %v642 = vadd.f32 0.0, %v641
  %v643 = vpop.f32.mrb[0].mxu0
  %644 = vmatprep.mubr.bf16.mxu0 0
  %645 = vmatmul.mubr.bf16.gmra.mrb[0].mxu0 %v413
  %v646 = vpop.f32.mrb[0].mxu0
  %v647 = vadd.f32 0.0, %v646
  %v648 = vpop.f32.mrb[0].mxu0
  %v649 = vpop.f32.mrb[0].mxu0
  %v650 = vadd.f32 0.0, %v649
  %v651 = vpop.f32.mrb[0].mxu0
  %652 = vmatprep.mubr.bf16.mxu0 0
  %653 = vmatmul.mubr.bf16.gmra.mrb[0].mxu0 %v416
  %v654 = vpop.f32.mrb[0].mxu0
  %v655 = vadd.f32 0.0, %v654
  %v656 = vpop.f32.mrb[0].mxu0
  %v657 = vpop.f32.mrb[0].mxu0
  %v658 = vadd.f32 0.0, %v657
  %v659 = vpop.f32.mrb[0].mxu0
  %660 = vmatprep.mubr.bf16.mxu0 0
  %661 = vmatmul.mubr.bf16.gmra.mrb[0].mxu0 %v419
  %v662 = vpop.f32.mrb[0].mxu0
  %v663 = vadd.f32 0.0, %v662
  %v664 = vpop.f32.mrb[0].mxu0
  %v665 = vpop.f32.mrb[0].mxu0
  %v666 = vadd.f32 0.0, %v665
  %v667 = vpop.f32.mrb[0].mxu0
  %668 = vmatprep.mubr.bf16.mxu0 0
  %669 = vmatmul.mubr.bf16.gmra.mrb[0].mxu0 %v422
  %v670 = vpop.f32.mrb[0].mxu0
  %v671 = vadd.f32 0.0, %v670
  %v672 = vpop.f32.mrb[0].mxu0
  %v673 = vpop.f32.mrb[0].mxu0
  %v674 = vadd.f32 0.0, %v673
  %v675 = vpop.f32.mrb[0].mxu0
  %676 = vmatprep.mubr.bf16.mxu0 0
  %677 = vmatmul.mubr.bf16.gmra.mrb[0].mxu0 %v425
  %v678 = vpop.f32.mrb[0].mxu0
  %v679 = vadd.f32 0.0, %v678
  %v680 = vpop.f32.mrb[0].mxu0
  %v681 = vpop.f32.mrb[0].mxu0
  %v682 = vadd.f32 0.0, %v681
  %v683 = vpop.f32.mrb[0].mxu0
  %684 = vmatprep.mubr.bf16.mxu0 0
  %685 = vmatmul.mubr.bf16.gmra.mrb[0].mxu0 %v428
  %v686 = vpop.f32.mrb[0].mxu0
  %v687 = vadd.f32 0.0, %v686
  %v688 = vpop.f32.mrb[0].mxu0
  %v689 = vpop.f32.mrb[0].mxu0
  %v690 = vadd.f32 0.0, %v689
  %v691 = vpop.f32.mrb[0].mxu0
  %692 = vmatprep.mubr.bf16.mxu0 0
  %693 = vmatmul.mubr.bf16.gmra.mrb[0].mxu0 %v431
  %v694 = vpop.f32.mrb[0].mxu0
  %v695 = vadd.f32 0.0, %v694
  %v696 = vpop.f32.mrb[0].mxu0
  %v697 = vpop.f32.mrb[0].mxu0
  %v698 = vadd.f32 0.0, %v697
  %v699 = vpop.f32.mrb[0].mxu0
  %700 = vmatprep.mubr.bf16.mxu0 0
  %701 = vmatmul.mubr.bf16.gmra.mrb[0].mxu0 %v434
  %v702 = vpop.f32.mrb[0].mxu0
  %v703 = vadd.f32 0.0, %v702
  %v704 = vpop.f32.mrb[0].mxu0
  %v705 = vpop.f32.mrb[0].mxu0
  %v706 = vadd.f32 0.0, %v705
  %v707 = vpop.f32.mrb[0].mxu0
  %708 = vmatprep.mubr.bf16.mxu0 0
  %709 = vmatmul.mubr.bf16.gmra.mrb[0].mxu0 %v437
  %v710 = vpop.f32.mrb[0].mxu0
  %v711 = vadd.f32 0.0, %v710
  %v712 = vpop.f32.mrb[0].mxu0
  %v713 = vpop.f32.mrb[0].mxu0
  %v714 = vadd.f32 0.0, %v713
  %v715 = vpop.f32.mrb[0].mxu0
  %716 = vmatprep.mubr.bf16.mxu0 0
  %717 = vmatmul.mubr.bf16.gmra.mrb[0].mxu0 %v440
  %v718 = vpop.f32.mrb[0].mxu0
  %v719 = vadd.f32 0.0, %v718
  %v720 = vpop.f32.mrb[0].mxu0
  %v721 = vpop.f32.mrb[0].mxu0
  %v722 = vadd.f32 0.0, %v721
  %v723 = vpop.f32.mrb[0].mxu0
  %724 = vmatprep.mubr.bf16.mxu0 0
  %725 = vmatmul.mubr.bf16.gmra.mrb[0].mxu0 %v443
  %v726 = vpop.f32.mrb[0].mxu0
  %v727 = vadd.f32 0.0, %v726
  %v728 = vpop.f32.mrb[0].mxu0
  %v729 = vpop.f32.mrb[0].mxu0
  %v730 = vadd.f32 0.0, %v729
  %v731 = vpop.f32.mrb[0].mxu0
  %732 = vmatprep.mubr.bf16.mxu0 0
  %733 = vmatmul.mubr.bf16.gmra.mrb[0].mxu0 %v446
  %v734 = vpop.f32.mrb[0].mxu0
  %v735 = vadd.f32 0.0, %v734
  %v736 = vpop.f32.mrb[0].mxu0
  %v737 = vpop.f32.mrb[0].mxu0
  %v738 = vadd.f32 0.0, %v737
  %v739 = vpop.f32.mrb[0].mxu0
  %740 = vdwg.mxu0
  %v805 = vunpack.c.l.b16 %v30
  %v806 = vunpack.c.h.b16 %v30
  %v807 = vunpack.c.l.b16 %v31
  %v808 = vunpack.c.h.b16 %v31
  %v809 = vunpack.c.l.b16 %v32
  %v810 = vunpack.c.h.b16 %v32
  %v811 = vunpack.c.l.b16 %v33
  %v812 = vunpack.c.h.b16 %v33
  %v813 = vunpack.c.l.b16 %v34
  %v814 = vunpack.c.h.b16 %v34
  %v815 = vunpack.c.l.b16 %v35
  %v816 = vunpack.c.h.b16 %v35
  %v817 = vunpack.c.l.b16 %v36
  %v818 = vunpack.c.h.b16 %v36
  %v819 = vunpack.c.l.b16 %v37
  %v820 = vunpack.c.h.b16 %v37
  %v821 = vunpack.c.l.b16 %v38
  %v822 = vunpack.c.h.b16 %v38
  %v823 = vunpack.c.l.b16 %v39
  %v824 = vunpack.c.h.b16 %v39
  %v825 = vunpack.c.l.b16 %v40
  %v826 = vunpack.c.h.b16 %v40
  %v827 = vunpack.c.l.b16 %v41
  %v828 = vunpack.c.h.b16 %v41
  %v829 = vunpack.c.l.b16 %v42
  %v830 = vunpack.c.h.b16 %v42
  %v831 = vunpack.c.l.b16 %v43
  %v832 = vunpack.c.h.b16 %v43
  %v833 = vunpack.c.l.b16 %v44
  %v834 = vunpack.c.h.b16 %v44
  %v835 = vunpack.c.l.b16 %v45
  %v836 = vunpack.c.h.b16 %v45
  %v837 = vunpack.c.l.b16 %v46
  %v838 = vunpack.c.h.b16 %v46
  %v839 = vunpack.c.l.b16 %v47
  %v840 = vunpack.c.h.b16 %v47
  %v841 = vunpack.c.l.b16 %v48
  %v842 = vunpack.c.h.b16 %v48
  %v843 = vunpack.c.l.b16 %v49
  %v844 = vunpack.c.h.b16 %v49
  %v845 = vunpack.c.l.b16 %v50
  %v846 = vunpack.c.h.b16 %v50
  %v847 = vunpack.c.l.b16 %v51
  %v848 = vunpack.c.h.b16 %v51
  %v849 = vunpack.c.l.b16 %v52
  %v850 = vunpack.c.h.b16 %v52
  %v851 = vunpack.c.l.b16 %v53
  %v852 = vunpack.c.h.b16 %v53
  %v853 = vunpack.c.l.b16 %v54
  %v854 = vunpack.c.h.b16 %v54
  %v855 = vunpack.c.l.b16 %v55
  %v856 = vunpack.c.h.b16 %v55
  %v857 = vunpack.c.l.b16 %v56
  %v858 = vunpack.c.h.b16 %v56
  %v859 = vunpack.c.l.b16 %v57
  %v860 = vunpack.c.h.b16 %v57
  %v861 = vunpack.c.l.b16 %v58
  %v862 = vunpack.c.h.b16 %v58
  %v863 = vunpack.c.l.b16 %v59
  %v864 = vunpack.c.h.b16 %v59
  %v865 = vunpack.c.l.b16 %v60
  %v866 = vunpack.c.h.b16 %v60
  %v867 = vunpack.c.l.b16 %v61
  %v868 = vunpack.c.h.b16 %v61
  %v869 = vunpack.c.l.b16 %v62
  %v870 = vunpack.c.h.b16 %v62
  %v871 = vunpack.c.l.b16 %v63
  %v872 = vunpack.c.h.b16 %v63
  %v873 = vunpack.c.l.b16 %v64
  %v874 = vunpack.c.h.b16 %v64
  %v875 = vunpack.c.l.b16 %v65
  %v876 = vunpack.c.h.b16 %v65
  %v877 = vunpack.c.l.b16 %v66
  %v878 = vunpack.c.h.b16 %v66
  %v879 = vunpack.c.l.b16 %v67
  %v880 = vunpack.c.h.b16 %v67
  %v881 = vunpack.c.l.b16 %v68
  %v882 = vunpack.c.h.b16 %v68
  %v883 = vunpack.c.l.b16 %v69
  %v884 = vunpack.c.h.b16 %v69
  %v885 = vunpack.c.l.b16 %v70
  %v886 = vunpack.c.h.b16 %v70
  %v887 = vunpack.c.l.b16 %v71
  %v888 = vunpack.c.h.b16 %v71
  %v889 = vunpack.c.l.b16 %v72
  %v890 = vunpack.c.h.b16 %v72
  %v891 = vunpack.c.l.b16 %v73
  %v892 = vunpack.c.h.b16 %v73
  %v893 = vunpack.c.l.b16 %v74
  %v894 = vunpack.c.h.b16 %v74
  %v895 = vunpack.c.l.b16 %v75
  %v896 = vunpack.c.h.b16 %v75
  %v897 = vunpack.c.l.b16 %v76
  %v898 = vunpack.c.h.b16 %v76
  %v899 = vunpack.c.l.b16 %v77
  %v900 = vunpack.c.h.b16 %v77
  %v901 = vunpack.c.l.b16 %v78
  %v902 = vunpack.c.h.b16 %v78
  %v903 = vunpack.c.l.b16 %v79
  %v904 = vunpack.c.h.b16 %v79
  %v905 = vunpack.c.l.b16 %v80
  %v906 = vunpack.c.h.b16 %v80
  %v907 = vunpack.c.l.b16 %v81
  %v908 = vunpack.c.h.b16 %v81
  %v909 = vunpack.c.l.b16 %v82
  %v910 = vunpack.c.h.b16 %v82
  %v911 = vunpack.c.l.b16 %v83
  %v912 = vunpack.c.h.b16 %v83
  %v913 = vunpack.c.l.b16 %v84
  %v914 = vunpack.c.h.b16 %v84
  %v915 = vunpack.c.l.b16 %v85
  %v916 = vunpack.c.h.b16 %v85
  %v917 = vunpack.c.l.b16 %v86
  %v918 = vunpack.c.h.b16 %v86
  %v919 = vunpack.c.l.b16 %v87
  %v920 = vunpack.c.h.b16 %v87
  %v921 = vunpack.c.l.b16 %v88
  %v922 = vunpack.c.h.b16 %v88
  %v923 = vunpack.c.l.b16 %v89
  %v924 = vunpack.c.h.b16 %v89
  %v925 = vunpack.c.l.b16 %v90
  %v926 = vunpack.c.h.b16 %v90
  %v927 = vunpack.c.l.b16 %v91
  %v928 = vunpack.c.h.b16 %v91
  %v929 = vunpack.c.l.b16 %v92
  %v930 = vunpack.c.h.b16 %v92
  %v931 = vunpack.c.l.b16 %v93
  %v932 = vunpack.c.h.b16 %v93
  %v933 = vpack.c.b16 %v807, %v805
  %v934 = vpack.c.b16 %v808, %v806
  %v935 = vpack.c.b16 %v811, %v809
  %v936 = vpack.c.b16 %v812, %v810
  %v937 = vpack.c.b16 %v815, %v813
  %v938 = vpack.c.b16 %v816, %v814
  %v939 = vpack.c.b16 %v819, %v817
  %v940 = vpack.c.b16 %v820, %v818
  %v941 = vpack.c.b16 %v823, %v821
  %v942 = vpack.c.b16 %v824, %v822
  %v943 = vpack.c.b16 %v827, %v825
  %v944 = vpack.c.b16 %v828, %v826
  %v945 = vpack.c.b16 %v831, %v829
  %v946 = vpack.c.b16 %v832, %v830
  %v947 = vpack.c.b16 %v835, %v833
  %v948 = vpack.c.b16 %v836, %v834
  %v949 = vpack.c.b16 %v839, %v837
  %v950 = vpack.c.b16 %v840, %v838
  %v951 = vpack.c.b16 %v843, %v841
  %v952 = vpack.c.b16 %v844, %v842
  %v953 = vpack.c.b16 %v847, %v845
  %v954 = vpack.c.b16 %v848, %v846
  %v955 = vpack.c.b16 %v851, %v849
  %v956 = vpack.c.b16 %v852, %v850
  %v957 = vpack.c.b16 %v855, %v853
  %v958 = vpack.c.b16 %v856, %v854
  %v959 = vpack.c.b16 %v859, %v857
  %v960 = vpack.c.b16 %v860, %v858
  %v961 = vpack.c.b16 %v863, %v861
  %v962 = vpack.c.b16 %v864, %v862
  %v963 = vpack.c.b16 %v867, %v865
  %v964 = vpack.c.b16 %v868, %v866
  %v965 = vpack.c.b16 %v871, %v869
  %v966 = vpack.c.b16 %v872, %v870
  %v967 = vpack.c.b16 %v875, %v873
  %v968 = vpack.c.b16 %v876, %v874
  %v969 = vpack.c.b16 %v879, %v877
  %v970 = vpack.c.b16 %v880, %v878
  %v971 = vpack.c.b16 %v883, %v881
  %v972 = vpack.c.b16 %v884, %v882
  %v973 = vpack.c.b16 %v887, %v885
  %v974 = vpack.c.b16 %v888, %v886
  %v975 = vpack.c.b16 %v891, %v889
  %v976 = vpack.c.b16 %v892, %v890
  %v977 = vpack.c.b16 %v895, %v893
  %v978 = vpack.c.b16 %v896, %v894
  %v979 = vpack.c.b16 %v899, %v897
  %v980 = vpack.c.b16 %v900, %v898
  %v981 = vpack.c.b16 %v903, %v901
  %v982 = vpack.c.b16 %v904, %v902
  %v983 = vpack.c.b16 %v907, %v905
  %v984 = vpack.c.b16 %v908, %v906
  %v985 = vpack.c.b16 %v911, %v909
  %v986 = vpack.c.b16 %v912, %v910
  %v987 = vpack.c.b16 %v915, %v913
  %v988 = vpack.c.b16 %v916, %v914
  %v989 = vpack.c.b16 %v919, %v917
  %v990 = vpack.c.b16 %v920, %v918
  %v991 = vpack.c.b16 %v923, %v921
  %v992 = vpack.c.b16 %v924, %v922
  %v993 = vpack.c.b16 %v927, %v925
  %v994 = vpack.c.b16 %v928, %v926
  %v995 = vpack.c.b16 %v931, %v929
  %v996 = vpack.c.b16 %v932, %v930
  %v1093 = vunpack.c.l.b16 %v94
  %v1094 = vunpack.c.l.b16 %v95
  %v1095 = vunpack.c.l.b16 %v96
  %v1096 = vunpack.c.l.b16 %v97
  %v1097 = vunpack.c.l.b16 %v98
  %v1098 = vunpack.c.l.b16 %v99
  %v1099 = vunpack.c.l.b16 %v100
  %v1100 = vunpack.c.l.b16 %v101
  %v1101 = vunpack.c.l.b16 %v102
  %v1102 = vunpack.c.l.b16 %v103
  %v1103 = vunpack.c.l.b16 %v104
  %v1104 = vunpack.c.l.b16 %v105
  %v1105 = vunpack.c.l.b16 %v106
  %v1106 = vunpack.c.l.b16 %v107
  %v1107 = vunpack.c.l.b16 %v108
  %v1108 = vunpack.c.l.b16 %v109
  %v1109 = vunpack.c.l.b16 %v110
  %v1110 = vunpack.c.l.b16 %v111
  %v1111 = vunpack.c.l.b16 %v112
  %v1112 = vunpack.c.l.b16 %v113
  %v1113 = vunpack.c.l.b16 %v114
  %v1114 = vunpack.c.l.b16 %v115
  %v1115 = vunpack.c.l.b16 %v116
  %v1116 = vunpack.c.l.b16 %v117
  %v1117 = vunpack.c.l.b16 %v118
  %v1118 = vunpack.c.l.b16 %v119
  %v1119 = vunpack.c.l.b16 %v120
  %v1120 = vunpack.c.l.b16 %v121
  %v1121 = vunpack.c.l.b16 %v122
  %v1122 = vunpack.c.l.b16 %v123
  %v1123 = vunpack.c.l.b16 %v124
  %v1124 = vunpack.c.l.b16 %v125
  %v1125 = vpack.c.b16 %v1094, %v1093
  %v1126 = vpack.c.b16 %v1096, %v1095
  %v1127 = vpack.c.b16 %v1098, %v1097
  %v1128 = vpack.c.b16 %v1100, %v1099
  %v1129 = vpack.c.b16 %v1102, %v1101
  %v1130 = vpack.c.b16 %v1104, %v1103
  %v1131 = vpack.c.b16 %v1106, %v1105
  %v1132 = vpack.c.b16 %v1108, %v1107
  %v1133 = vpack.c.b16 %v1110, %v1109
  %v1134 = vpack.c.b16 %v1112, %v1111
  %v1135 = vpack.c.b16 %v1114, %v1113
  %v1136 = vpack.c.b16 %v1116, %v1115
  %v1137 = vpack.c.b16 %v1118, %v1117
  %v1138 = vpack.c.b16 %v1120, %v1119
  %v1139 = vpack.c.b16 %v1122, %v1121
  %v1140 = vpack.c.b16 %v1124, %v1123
  %1157 = vmatprep.subr.bf16.mxu0 0
  %1158 = vmatpush1.bf16.msra.mxu0 %v1125
  %1159 = vmatprep.subr.bf16.mxu0 0
  %1160 = vmatpush1.bf16.msra.mxu0 %v1126
  %1161 = vmatprep.subr.bf16.mxu0 0
  %1162 = vmatpush1.bf16.msra.mxu0 %v1127
  %1163 = vmatprep.subr.bf16.mxu0 0
  %1164 = vmatpush1.bf16.msra.mxu0 %v1128
  %1165 = vmatprep.subr.bf16.mxu0 0
  %1166 = vmatpush1.bf16.msra.mxu0 %v1129
  %1167 = vmatprep.subr.bf16.mxu0 0
  %1168 = vmatpush1.bf16.msra.mxu0 %v1130
  %1169 = vmatprep.subr.bf16.mxu0 0
  %1170 = vmatpush1.bf16.msra.mxu0 %v1131
  %1171 = vmatprep.subr.bf16.mxu0 0
  %1172 = vmatpush1.bf16.msra.mxu0 %v1132
  %1173 = vmatprep.subr.bf16.mxu0 0
  %1174 = vmatpush1.bf16.msra.mxu0 %v1133
  %1175 = vmatprep.subr.bf16.mxu0 0
  %1176 = vmatpush1.bf16.msra.mxu0 %v1134
  %1177 = vmatprep.subr.bf16.mxu0 0
  %1178 = vmatpush1.bf16.msra.mxu0 %v1135
  %1179 = vmatprep.subr.bf16.mxu0 0
  %1180 = vmatpush1.bf16.msra.mxu0 %v1136
  %1181 = vmatprep.subr.bf16.mxu0 0
  %1182 = vmatpush1.bf16.msra.mxu0 %v1137
  %1183 = vmatprep.subr.bf16.mxu0 0
  %1184 = vmatpush1.bf16.msra.mxu0 %v1138
  %1185 = vmatprep.subr.bf16.mxu0 0
  %1186 = vmatpush1.bf16.msra.mxu0 %v1139
  %1187 = vmatprep.subr.bf16.mxu0 0
  %1188 = vmatpush1.bf16.msra.mxu0 %v1140
  %1189 = vmatprep.mubr.bf16.mxu0 %v934
  %1190 = vmatmul.mubr.bf16.gmra.mrb[0].mxu0 %v933
  %v1191 = vpop.f32.mrb[0].mxu0
  %v1192 = vadd.f32 %v487, %v1191
  %v1193 = vpop.f32.mrb[0].mxu0
  %v1194 = vpop.f32.mrb[0].mxu0
  %v1195 = vadd.f32 %v490, %v1194
  %v1196 = vpop.f32.mrb[0].mxu0
  %1197 = vmatprep.mubr.bf16.mxu0 %v936
  %1198 = vmatmul.mubr.bf16.gmra.mrb[0].mxu0 %v935
  %v1199 = vpop.f32.mrb[0].mxu0
  %v1200 = vadd.f32 %v495, %v1199
  %v1201 = vpop.f32.mrb[0].mxu0
  %v1202 = vpop.f32.mrb[0].mxu0
  %v1203 = vadd.f32 %v498, %v1202
  %v1204 = vpop.f32.mrb[0].mxu0
  %1205 = vmatprep.mubr.bf16.mxu0 %v938
  %1206 = vmatmul.mubr.bf16.gmra.mrb[0].mxu0 %v937
  %v1207 = vpop.f32.mrb[0].mxu0
  %v1208 = vadd.f32 %v503, %v1207
  %v1209 = vpop.f32.mrb[0].mxu0
  %v1210 = vpop.f32.mrb[0].mxu0
  %v1211 = vadd.f32 %v506, %v1210
  %v1212 = vpop.f32.mrb[0].mxu0
  %1213 = vmatprep.mubr.bf16.mxu0 %v940
  %1214 = vmatmul.mubr.bf16.gmra.mrb[0].mxu0 %v939
  %v1215 = vpop.f32.mrb[0].mxu0
  %v1216 = vadd.f32 %v511, %v1215
  %v1217 = vpop.f32.mrb[0].mxu0
  %v1218 = vpop.f32.mrb[0].mxu0
  %v1219 = vadd.f32 %v514, %v1218
  %v1220 = vpop.f32.mrb[0].mxu0
  %1221 = vmatprep.mubr.bf16.mxu0 %v942
  %1222 = vmatmul.mubr.bf16.gmra.mrb[0].mxu0 %v941
  %v1223 = vpop.f32.mrb[0].mxu0
  %v1224 = vadd.f32 %v519, %v1223
  %v1225 = vpop.f32.mrb[0].mxu0
  %v1226 = vpop.f32.mrb[0].mxu0
  %v1227 = vadd.f32 %v522, %v1226
  %v1228 = vpop.f32.mrb[0].mxu0
  %1229 = vmatprep.mubr.bf16.mxu0 %v944
  %1230 = vmatmul.mubr.bf16.gmra.mrb[0].mxu0 %v943
  %v1231 = vpop.f32.mrb[0].mxu0
  %v1232 = vadd.f32 %v527, %v1231
  %v1233 = vpop.f32.mrb[0].mxu0
  %v1234 = vpop.f32.mrb[0].mxu0
  %v1235 = vadd.f32 %v530, %v1234
  %v1236 = vpop.f32.mrb[0].mxu0
  %1237 = vmatprep.mubr.bf16.mxu0 %v946
  %1238 = vmatmul.mubr.bf16.gmra.mrb[0].mxu0 %v945
  %v1239 = vpop.f32.mrb[0].mxu0
  %v1240 = vadd.f32 %v535, %v1239
  %v1241 = vpop.f32.mrb[0].mxu0
  %v1242 = vpop.f32.mrb[0].mxu0
  %v1243 = vadd.f32 %v538, %v1242
  %v1244 = vpop.f32.mrb[0].mxu0
  %1245 = vmatprep.mubr.bf16.mxu0 %v948
  %1246 = vmatmul.mubr.bf16.gmra.mrb[0].mxu0 %v947
  %v1247 = vpop.f32.mrb[0].mxu0
  %v1248 = vadd.f32 %v543, %v1247
  %v1249 = vpop.f32.mrb[0].mxu0
  %v1250 = vpop.f32.mrb[0].mxu0
  %v1251 = vadd.f32 %v546, %v1250
  %v1252 = vpop.f32.mrb[0].mxu0
  %1253 = vmatprep.mubr.bf16.mxu0 %v950
  %1254 = vmatmul.mubr.bf16.gmra.mrb[0].mxu0 %v949
  %v1255 = vpop.f32.mrb[0].mxu0
  %v1256 = vadd.f32 %v551, %v1255
  %v1257 = vpop.f32.mrb[0].mxu0
  %v1258 = vpop.f32.mrb[0].mxu0
  %v1259 = vadd.f32 %v554, %v1258
  %v1260 = vpop.f32.mrb[0].mxu0
  %1261 = vmatprep.mubr.bf16.mxu0 %v952
  %1262 = vmatmul.mubr.bf16.gmra.mrb[0].mxu0 %v951
  %v1263 = vpop.f32.mrb[0].mxu0
  %v1264 = vadd.f32 %v559, %v1263
  %v1265 = vpop.f32.mrb[0].mxu0
  %v1266 = vpop.f32.mrb[0].mxu0
  %v1267 = vadd.f32 %v562, %v1266
  %v1268 = vpop.f32.mrb[0].mxu0
  %1269 = vmatprep.mubr.bf16.mxu0 %v954
  %1270 = vmatmul.mubr.bf16.gmra.mrb[0].mxu0 %v953
  %v1271 = vpop.f32.mrb[0].mxu0
  %v1272 = vadd.f32 %v567, %v1271
  %v1273 = vpop.f32.mrb[0].mxu0
  %v1274 = vpop.f32.mrb[0].mxu0
  %v1275 = vadd.f32 %v570, %v1274
  %v1276 = vpop.f32.mrb[0].mxu0
  %1277 = vmatprep.mubr.bf16.mxu0 %v956
  %1278 = vmatmul.mubr.bf16.gmra.mrb[0].mxu0 %v955
  %v1279 = vpop.f32.mrb[0].mxu0
  %v1280 = vadd.f32 %v575, %v1279
  %v1281 = vpop.f32.mrb[0].mxu0
  %v1282 = vpop.f32.mrb[0].mxu0
  %v1283 = vadd.f32 %v578, %v1282
  %v1284 = vpop.f32.mrb[0].mxu0
  %1285 = vmatprep.mubr.bf16.mxu0 %v958
  %1286 = vmatmul.mubr.bf16.gmra.mrb[0].mxu0 %v957
  %v1287 = vpop.f32.mrb[0].mxu0
  %v1288 = vadd.f32 %v583, %v1287
  %v1289 = vpop.f32.mrb[0].mxu0
  %v1290 = vpop.f32.mrb[0].mxu0
  %v1291 = vadd.f32 %v586, %v1290
  %v1292 = vpop.f32.mrb[0].mxu0
  %1293 = vmatprep.mubr.bf16.mxu0 %v960
  %1294 = vmatmul.mubr.bf16.gmra.mrb[0].mxu0 %v959
  %v1295 = vpop.f32.mrb[0].mxu0
  %v1296 = vadd.f32 %v591, %v1295
  %v1297 = vpop.f32.mrb[0].mxu0
  %v1298 = vpop.f32.mrb[0].mxu0
  %v1299 = vadd.f32 %v594, %v1298
  %v1300 = vpop.f32.mrb[0].mxu0
  %1301 = vmatprep.mubr.bf16.mxu0 %v962
  %1302 = vmatmul.mubr.bf16.gmra.mrb[0].mxu0 %v961
  %v1303 = vpop.f32.mrb[0].mxu0
  %v1304 = vadd.f32 %v599, %v1303
  %v1305 = vpop.f32.mrb[0].mxu0
  %v1306 = vpop.f32.mrb[0].mxu0
  %v1307 = vadd.f32 %v602, %v1306
  %v1308 = vpop.f32.mrb[0].mxu0
  %1309 = vmatprep.mubr.bf16.mxu0 %v964
  %1310 = vmatmul.mubr.bf16.gmra.mrb[0].mxu0 %v963
  %v1311 = vpop.f32.mrb[0].mxu0
  %v1312 = vadd.f32 %v607, %v1311
  %v1313 = vpop.f32.mrb[0].mxu0
  %v1314 = vpop.f32.mrb[0].mxu0
  %v1315 = vadd.f32 %v610, %v1314
  %v1316 = vpop.f32.mrb[0].mxu0
  %1317 = vmatprep.mubr.bf16.mxu0 %v966
  %1318 = vmatmul.mubr.bf16.gmra.mrb[0].mxu0 %v965
  %v1319 = vpop.f32.mrb[0].mxu0
  %v1320 = vadd.f32 %v615, %v1319
  %v1321 = vpop.f32.mrb[0].mxu0
  %v1322 = vpop.f32.mrb[0].mxu0
  %v1323 = vadd.f32 %v618, %v1322
  %v1324 = vpop.f32.mrb[0].mxu0
  %1325 = vmatprep.mubr.bf16.mxu0 %v968
  %1326 = vmatmul.mubr.bf16.gmra.mrb[0].mxu0 %v967
  %v1327 = vpop.f32.mrb[0].mxu0
  %v1328 = vadd.f32 %v623, %v1327
  %v1329 = vpop.f32.mrb[0].mxu0
  %v1330 = vpop.f32.mrb[0].mxu0
  %v1331 = vadd.f32 %v626, %v1330
  %v1332 = vpop.f32.mrb[0].mxu0
  %1333 = vmatprep.mubr.bf16.mxu0 %v970
  %1334 = vmatmul.mubr.bf16.gmra.mrb[0].mxu0 %v969
  %v1335 = vpop.f32.mrb[0].mxu0
  %v1336 = vadd.f32 %v631, %v1335
  %v1337 = vpop.f32.mrb[0].mxu0
  %v1338 = vpop.f32.mrb[0].mxu0
  %v1339 = vadd.f32 %v634, %v1338
  %v1340 = vpop.f32.mrb[0].mxu0
  %1341 = vmatprep.mubr.bf16.mxu0 %v972
  %1342 = vmatmul.mubr.bf16.gmra.mrb[0].mxu0 %v971
  %v1343 = vpop.f32.mrb[0].mxu0
  %v1344 = vadd.f32 %v639, %v1343
  %v1345 = vpop.f32.mrb[0].mxu0
  %v1346 = vpop.f32.mrb[0].mxu0
  %v1347 = vadd.f32 %v642, %v1346
  %v1348 = vpop.f32.mrb[0].mxu0
  %1349 = vmatprep.mubr.bf16.mxu0 %v974
  %1350 = vmatmul.mubr.bf16.gmra.mrb[0].mxu0 %v973
  %v1351 = vpop.f32.mrb[0].mxu0
  %v1352 = vadd.f32 %v647, %v1351
  %v1353 = vpop.f32.mrb[0].mxu0
  %v1354 = vpop.f32.mrb[0].mxu0
  %v1355 = vadd.f32 %v650, %v1354
  %v1356 = vpop.f32.mrb[0].mxu0
  %1357 = vmatprep.mubr.bf16.mxu0 %v976
  %1358 = vmatmul.mubr.bf16.gmra.mrb[0].mxu0 %v975
  %v1359 = vpop.f32.mrb[0].mxu0
  %v1360 = vadd.f32 %v655, %v1359
  %v1361 = vpop.f32.mrb[0].mxu0
  %v1362 = vpop.f32.mrb[0].mxu0
  %v1363 = vadd.f32 %v658, %v1362
  %v1364 = vpop.f32.mrb[0].mxu0
  %1365 = vmatprep.mubr.bf16.mxu0 %v978
  %1366 = vmatmul.mubr.bf16.gmra.mrb[0].mxu0 %v977
  %v1367 = vpop.f32.mrb[0].mxu0
  %v1368 = vadd.f32 %v663, %v1367
  %v1369 = vpop.f32.mrb[0].mxu0
  %v1370 = vpop.f32.mrb[0].mxu0
  %v1371 = vadd.f32 %v666, %v1370
  %v1372 = vpop.f32.mrb[0].mxu0
  %1373 = vmatprep.mubr.bf16.mxu0 %v980
  %1374 = vmatmul.mubr.bf16.gmra.mrb[0].mxu0 %v979
  %v1375 = vpop.f32.mrb[0].mxu0
  %v1376 = vadd.f32 %v671, %v1375
  %v1377 = vpop.f32.mrb[0].mxu0
  %v1378 = vpop.f32.mrb[0].mxu0
  %v1379 = vadd.f32 %v674, %v1378
  %v1380 = vpop.f32.mrb[0].mxu0
  %1381 = vmatprep.mubr.bf16.mxu0 %v982
  %1382 = vmatmul.mubr.bf16.gmra.mrb[0].mxu0 %v981
  %v1383 = vpop.f32.mrb[0].mxu0
  %v1384 = vadd.f32 %v679, %v1383
  %v1385 = vpop.f32.mrb[0].mxu0
  %v1386 = vpop.f32.mrb[0].mxu0
  %v1387 = vadd.f32 %v682, %v1386
  %v1388 = vpop.f32.mrb[0].mxu0
  %1389 = vmatprep.mubr.bf16.mxu0 %v984
  %1390 = vmatmul.mubr.bf16.gmra.mrb[0].mxu0 %v983
  %v1391 = vpop.f32.mrb[0].mxu0
  %v1392 = vadd.f32 %v687, %v1391
  %v1393 = vpop.f32.mrb[0].mxu0
  %v1394 = vpop.f32.mrb[0].mxu0
  %v1395 = vadd.f32 %v690, %v1394
  %v1396 = vpop.f32.mrb[0].mxu0
  %1397 = vmatprep.mubr.bf16.mxu0 %v986
  %1398 = vmatmul.mubr.bf16.gmra.mrb[0].mxu0 %v985
  %v1399 = vpop.f32.mrb[0].mxu0
  %v1400 = vadd.f32 %v695, %v1399
  %v1401 = vpop.f32.mrb[0].mxu0
  %v1402 = vpop.f32.mrb[0].mxu0
  %v1403 = vadd.f32 %v698, %v1402
  %v1404 = vpop.f32.mrb[0].mxu0
  %1405 = vmatprep.mubr.bf16.mxu0 %v988
  %1406 = vmatmul.mubr.bf16.gmra.mrb[0].mxu0 %v987
  %v1407 = vpop.f32.mrb[0].mxu0
  %v1408 = vadd.f32 %v703, %v1407
  %v1409 = vpop.f32.mrb[0].mxu0
  %v1410 = vpop.f32.mrb[0].mxu0
  %v1411 = vadd.f32 %v706, %v1410
  %v1412 = vpop.f32.mrb[0].mxu0
  %1413 = vmatprep.mubr.bf16.mxu0 %v990
  %1414 = vmatmul.mubr.bf16.gmra.mrb[0].mxu0 %v989
  %v1415 = vpop.f32.mrb[0].mxu0
  %v1416 = vadd.f32 %v711, %v1415
  %v1417 = vpop.f32.mrb[0].mxu0
  %v1418 = vpop.f32.mrb[0].mxu0
  %v1419 = vadd.f32 %v714, %v1418
  %v1420 = vpop.f32.mrb[0].mxu0
  %1421 = vmatprep.mubr.bf16.mxu0 %v992
  %1422 = vmatmul.mubr.bf16.gmra.mrb[0].mxu0 %v991
  %v1423 = vpop.f32.mrb[0].mxu0
  %v1424 = vadd.f32 %v719, %v1423
  %v1425 = vpop.f32.mrb[0].mxu0
  %v1426 = vpop.f32.mrb[0].mxu0
  %v1427 = vadd.f32 %v722, %v1426
  %v1428 = vpop.f32.mrb[0].mxu0
  %1429 = vmatprep.mubr.bf16.mxu0 %v994
  %1430 = vmatmul.mubr.bf16.gmra.mrb[0].mxu0 %v993
  %v1431 = vpop.f32.mrb[0].mxu0
  %v1432 = vadd.f32 %v727, %v1431
  %v1433 = vpop.f32.mrb[0].mxu0
  %v1434 = vpop.f32.mrb[0].mxu0
  %v1435 = vadd.f32 %v730, %v1434
  %v1436 = vpop.f32.mrb[0].mxu0
  %1437 = vmatprep.mubr.bf16.mxu0 %v996
  %1438 = vmatmul.mubr.bf16.gmra.mrb[0].mxu0 %v995
  %v1439 = vpop.f32.mrb[0].mxu0
  %v1440 = vadd.f32 %v735, %v1439
  %v1441 = vpop.f32.mrb[0].mxu0
  %v1442 = vpop.f32.mrb[0].mxu0
  %v1443 = vadd.f32 %v738, %v1442
  %v1444 = vpop.f32.mrb[0].mxu0
  %1445 = vdwg.mxu0
  %v1446 = vlaneseq
  %v1447 = vshrl.u32 %v1446, 7
  %v1448 = vsub.s32 0, %v1447
  %v1449 = vrot.slane %v24, %v1448
  %v1450 = vadd.f32 %v1192, %v1449
  %v1451 = vadd.f32 %v1195, %v1449
  %v1452 = vadd.f32 %v1200, %v1449
  %v1453 = vadd.f32 %v1203, %v1449
  %v1454 = vadd.f32 %v1208, %v1449
  %v1455 = vadd.f32 %v1211, %v1449
  %v1456 = vadd.f32 %v1216, %v1449
  %v1457 = vadd.f32 %v1219, %v1449
  %v1458 = vadd.f32 %v1224, %v1449
  %v1459 = vadd.f32 %v1227, %v1449
  %v1460 = vadd.f32 %v1232, %v1449
  %v1461 = vadd.f32 %v1235, %v1449
  %v1462 = vadd.f32 %v1240, %v1449
  %v1463 = vadd.f32 %v1243, %v1449
  %v1464 = vadd.f32 %v1248, %v1449
  %v1465 = vadd.f32 %v1251, %v1449
  %v1466 = vadd.f32 %v1256, %v1449
  %v1467 = vadd.f32 %v1259, %v1449
  %v1468 = vadd.f32 %v1264, %v1449
  %v1469 = vadd.f32 %v1267, %v1449
  %v1470 = vadd.f32 %v1272, %v1449
  %v1471 = vadd.f32 %v1275, %v1449
  %v1472 = vadd.f32 %v1280, %v1449
  %v1473 = vadd.f32 %v1283, %v1449
  %v1474 = vadd.f32 %v1288, %v1449
  %v1475 = vadd.f32 %v1291, %v1449
  %v1476 = vadd.f32 %v1296, %v1449
  %v1477 = vadd.f32 %v1299, %v1449
  %v1478 = vadd.f32 %v1304, %v1449
  %v1479 = vadd.f32 %v1307, %v1449
  %v1480 = vadd.f32 %v1312, %v1449
  %v1481 = vadd.f32 %v1315, %v1449
  %v1482 = vadd.f32 %v1320, %v1449
  %v1483 = vadd.f32 %v1323, %v1449
  %v1484 = vadd.f32 %v1328, %v1449
  %v1485 = vadd.f32 %v1331, %v1449
  %v1486 = vadd.f32 %v1336, %v1449
  %v1487 = vadd.f32 %v1339, %v1449
  %v1488 = vadd.f32 %v1344, %v1449
  %v1489 = vadd.f32 %v1347, %v1449
  %v1490 = vadd.f32 %v1352, %v1449
  %v1491 = vadd.f32 %v1355, %v1449
  %v1492 = vadd.f32 %v1360, %v1449
  %v1493 = vadd.f32 %v1363, %v1449
  %v1494 = vadd.f32 %v1368, %v1449
  %v1495 = vadd.f32 %v1371, %v1449
  %v1496 = vadd.f32 %v1376, %v1449
  %v1497 = vadd.f32 %v1379, %v1449
  %v1498 = vadd.f32 %v1384, %v1449
  %v1499 = vadd.f32 %v1387, %v1449
  %v1500 = vadd.f32 %v1392, %v1449
  %v1501 = vadd.f32 %v1395, %v1449
  %v1502 = vadd.f32 %v1400, %v1449
  %v1503 = vadd.f32 %v1403, %v1449
  %v1504 = vadd.f32 %v1408, %v1449
  %v1505 = vadd.f32 %v1411, %v1449
  %v1506 = vadd.f32 %v1416, %v1449
  %v1507 = vadd.f32 %v1419, %v1449
  %v1508 = vadd.f32 %v1424, %v1449
  %v1509 = vadd.f32 %v1427, %v1449
  %v1510 = vadd.f32 %v1432, %v1449
  %v1511 = vadd.f32 %v1435, %v1449
  %v1512 = vadd.f32 %v1440, %v1449
  %v1513 = vadd.f32 %v1443, %v1449
  %v1514 = vmax.f32 %v1450, 0.0
  %v1515 = vmax.f32 %v1451, 0.0
  %v1516 = vmax.f32 %v1452, 0.0
  %v1517 = vmax.f32 %v1453, 0.0
  %v1518 = vmax.f32 %v1454, 0.0
  %v1519 = vmax.f32 %v1455, 0.0
  %v1520 = vmax.f32 %v1456, 0.0
  %v1521 = vmax.f32 %v1457, 0.0
  %v1522 = vmax.f32 %v1458, 0.0
  %v1523 = vmax.f32 %v1459, 0.0
  %v1524 = vmax.f32 %v1460, 0.0
  %v1525 = vmax.f32 %v1461, 0.0
  %v1526 = vmax.f32 %v1462, 0.0
  %v1527 = vmax.f32 %v1463, 0.0
  %v1528 = vmax.f32 %v1464, 0.0
  %v1529 = vmax.f32 %v1465, 0.0
  %v1530 = vmax.f32 %v1466, 0.0
  %v1531 = vmax.f32 %v1467, 0.0
  %v1532 = vmax.f32 %v1468, 0.0
  %v1533 = vmax.f32 %v1469, 0.0
  %v1534 = vmax.f32 %v1470, 0.0
  %v1535 = vmax.f32 %v1471, 0.0
  %v1536 = vmax.f32 %v1472, 0.0
  %v1537 = vmax.f32 %v1473, 0.0
  %v1538 = vmax.f32 %v1474, 0.0
  %v1539 = vmax.f32 %v1475, 0.0
  %v1540 = vmax.f32 %v1476, 0.0
  %v1541 = vmax.f32 %v1477, 0.0
  %v1542 = vmax.f32 %v1478, 0.0
  %v1543 = vmax.f32 %v1479, 0.0
  %v1544 = vmax.f32 %v1480, 0.0
  %v1545 = vmax.f32 %v1481, 0.0
  %v1546 = vmax.f32 %v1482, 0.0
  %v1547 = vmax.f32 %v1483, 0.0
  %v1548 = vmax.f32 %v1484, 0.0
  %v1549 = vmax.f32 %v1485, 0.0
  %v1550 = vmax.f32 %v1486, 0.0
  %v1551 = vmax.f32 %v1487, 0.0
  %v1552 = vmax.f32 %v1488, 0.0
  %v1553 = vmax.f32 %v1489, 0.0
  %v1554 = vmax.f32 %v1490, 0.0
  %v1555 = vmax.f32 %v1491, 0.0
  %v1556 = vmax.f32 %v1492, 0.0
  %v1557 = vmax.f32 %v1493, 0.0
  %v1558 = vmax.f32 %v1494, 0.0
  %v1559 = vmax.f32 %v1495, 0.0
  %v1560 = vmax.f32 %v1496, 0.0
  %v1561 = vmax.f32 %v1497, 0.0
  %v1562 = vmax.f32 %v1498, 0.0
  %v1563 = vmax.f32 %v1499, 0.0
  %v1564 = vmax.f32 %v1500, 0.0
  %v1565 = vmax.f32 %v1501, 0.0
  %v1566 = vmax.f32 %v1502, 0.0
  %v1567 = vmax.f32 %v1503, 0.0
  %v1568 = vmax.f32 %v1504, 0.0
  %v1569 = vmax.f32 %v1505, 0.0
  %v1570 = vmax.f32 %v1506, 0.0
  %v1571 = vmax.f32 %v1507, 0.0
  %v1572 = vmax.f32 %v1508, 0.0
  %v1573 = vmax.f32 %v1509, 0.0
  %v1574 = vmax.f32 %v1510, 0.0
  %v1575 = vmax.f32 %v1511, 0.0
  %v1576 = vmax.f32 %v1512, 0.0
  %v1577 = vmax.f32 %v1513, 0.0
  %v1578 = vpack.c.bf16 %v1515, %v1514
  %v1579 = vpack.c.bf16 %v1517, %v1516
  %v1580 = vpack.c.bf16 %v1519, %v1518
  %v1581 = vpack.c.bf16 %v1521, %v1520
  %v1582 = vpack.c.bf16 %v1523, %v1522
  %v1583 = vpack.c.bf16 %v1525, %v1524
  %v1584 = vpack.c.bf16 %v1527, %v1526
  %v1585 = vpack.c.bf16 %v1529, %v1528
  %v1586 = vpack.c.bf16 %v1531, %v1530
  %v1587 = vpack.c.bf16 %v1533, %v1532
  %v1588 = vpack.c.bf16 %v1535, %v1534
  %v1589 = vpack.c.bf16 %v1537, %v1536
  %v1590 = vpack.c.bf16 %v1539, %v1538
  %v1591 = vpack.c.bf16 %v1541, %v1540
  %v1592 = vpack.c.bf16 %v1543, %v1542
  %v1593 = vpack.c.bf16 %v1545, %v1544
  %v1594 = vpack.c.bf16 %v1547, %v1546
  %v1595 = vpack.c.bf16 %v1549, %v1548
  %v1596 = vpack.c.bf16 %v1551, %v1550
  %v1597 = vpack.c.bf16 %v1553, %v1552
  %v1598 = vpack.c.bf16 %v1555, %v1554
  %v1599 = vpack.c.bf16 %v1557, %v1556
  %v1600 = vpack.c.bf16 %v1559, %v1558
  %v1601 = vpack.c.bf16 %v1561, %v1560
  %v1602 = vpack.c.bf16 %v1563, %v1562
  %v1603 = vpack.c.bf16 %v1565, %v1564
  %v1604 = vpack.c.bf16 %v1567, %v1566
  %v1605 = vpack.c.bf16 %v1569, %v1568
  %v1606 = vpack.c.bf16 %v1571, %v1570
  %v1607 = vpack.c.bf16 %v1573, %v1572
  %v1608 = vpack.c.bf16 %v1575, %v1574
  %v1609 = vpack.c.bf16 %v1577, %v1576
  %v1610 = vld [vmem:[%s4] sm:$0xf]
  %v1611 = vld [vmem:[%s4 + $0x4] sm:$0xf]
  %v1612 = vld [vmem:[%s4 + $0x8] sm:$0xf]
  %v1613 = vld [vmem:[%s4 + $0xc] sm:$0xf]
  %v1614 = vld [vmem:[%s4 + $0x10] sm:$0xf]
  %v1615 = vld [vmem:[%s4 + $0x14] sm:$0xf]
  %v1616 = vld [vmem:[%s4 + $0x18] sm:$0xf]
  %v1617 = vld [vmem:[%s4 + $0x1c] sm:$0xf]
  %v1618 = vld [vmem:[%s4 + $0x20] sm:$0xf]
  %v1619 = vld [vmem:[%s4 + $0x24] sm:$0xf]
  %v1620 = vld [vmem:[%s4 + $0x28] sm:$0xf]
  %v1621 = vld [vmem:[%s4 + $0x2c] sm:$0xf]
  %v1622 = vld [vmem:[%s4 + $0x30] sm:$0xf]
  %v1623 = vld [vmem:[%s4 + $0x34] sm:$0xf]
  %v1624 = vld [vmem:[%s4 + $0x38] sm:$0xf]
  %v1625 = vld [vmem:[%s4 + $0x3c] sm:$0xf]
  %v1626 = vlaneseq
  %v1627 = vshrl.u32 %v1626, 7
  %v1628 = vsub.s32 0, %v1627
  %v1629 = vrot.slane %v25, %v1628
  %v1646 = vunpack.c.l.b16 %v1610
  %v1647 = vunpack.c.l.b16 %v1611
  %v1648 = vunpack.c.l.b16 %v1612
  %v1649 = vunpack.c.l.b16 %v1613
  %v1650 = vunpack.c.l.b16 %v1614
  %v1651 = vunpack.c.l.b16 %v1615
  %v1652 = vunpack.c.l.b16 %v1616
  %v1653 = vunpack.c.l.b16 %v1617
  %v1654 = vunpack.c.l.b16 %v1618
  %v1655 = vunpack.c.l.b16 %v1619
  %v1656 = vunpack.c.l.b16 %v1620
  %v1657 = vunpack.c.l.b16 %v1621
  %v1658 = vunpack.c.l.b16 %v1622
  %v1659 = vunpack.c.l.b16 %v1623
  %v1660 = vunpack.c.l.b16 %v1624
  %v1661 = vunpack.c.l.b16 %v1625
  %v1662 = vpack.c.b16 %v1647, %v1646
  %v1663 = vpack.c.b16 %v1649, %v1648
  %v1664 = vpack.c.b16 %v1651, %v1650
  %v1665 = vpack.c.b16 %v1653, %v1652
  %v1666 = vpack.c.b16 %v1655, %v1654
  %v1667 = vpack.c.b16 %v1657, %v1656
  %v1668 = vpack.c.b16 %v1659, %v1658
  %v1669 = vpack.c.b16 %v1661, %v1660
  %1678 = vmatprep.subr.bf16.mxu0 0
  %1679 = vmatpush1.bf16.msra.mxu0 %v1662
  %1680 = vmatprep.subr.bf16.mxu0 0
  %1681 = vmatpush1.bf16.msra.mxu0 %v1663
  %1682 = vmatprep.subr.bf16.mxu0 0
  %1683 = vmatpush1.bf16.msra.mxu0 %v1664
  %1684 = vmatprep.subr.bf16.mxu0 0
  %1685 = vmatpush1.bf16.msra.mxu0 %v1665
  %1686 = vmatprep.subr.bf16.mxu0 0
  %1687 = vmatpush1.bf16.msra.mxu0 %v1666
  %1688 = vmatprep.subr.bf16.mxu0 0
  %1689 = vmatpush1.bf16.msra.mxu0 %v1667
  %1690 = vmatprep.subr.bf16.mxu0 0
  %1691 = vmatpush1.bf16.msra.mxu0 %v1668
  %1692 = vmatprep.subr.bf16.mxu0 0
  %1693 = vmatpush1.bf16.msra.mxu0 %v1669
  %1694 = vmatprep.subr.bf16.mxu0 0
  %1695 = vmatpush1.bf16.msra.mxu0 0
  %1696 = vmatprep.subr.bf16.mxu0 0
  %1697 = vmatpush1.bf16.msra.mxu0 0
  %1698 = vmatprep.subr.bf16.mxu0 0
  %1699 = vmatpush1.bf16.msra.mxu0 0
  %1700 = vmatprep.subr.bf16.mxu0 0
  %1701 = vmatpush1.bf16.msra.mxu0 0
  %1702 = vmatprep.subr.bf16.mxu0 0
  %1703 = vmatpush1.bf16.msra.mxu0 0
  %1704 = vmatprep.subr.bf16.mxu0 0
  %1705 = vmatpush1.bf16.msra.mxu0 0
  %1706 = vmatprep.subr.bf16.mxu0 0
  %1707 = vmatpush1.bf16.msra.mxu0 0
  %1708 = vmatprep.subr.bf16.mxu0 0
  %1709 = vmatpush1.bf16.msra.mxu0 0
  %1710 = vmatprep.mubr.bf16.mxu0 0
  %1711 = vmatmul.mubr.bf16.gmra.mrb[0].mxu0 %v1578
  %v1712 = vpop.f32.mrb[0].mxu0
  %v1713 = vadd.f32 %v1629, %v1712
  %v1714 = vpop.f32.mrb[0].mxu0
  %v1715 = vpop.f32.mrb[0].mxu0
  %v1716 = vadd.f32 %v1629, %v1715
  %v1717 = vpop.f32.mrb[0].mxu0
  %1718 = vmatprep.mubr.bf16.mxu0 0
  %1719 = vmatmul.mubr.bf16.gmra.mrb[0].mxu0 %v1579
  %v1720 = vpop.f32.mrb[0].mxu0
  %v1721 = vadd.f32 %v1629, %v1720
  %v1722 = vpop.f32.mrb[0].mxu0
  %v1723 = vpop.f32.mrb[0].mxu0
  %v1724 = vadd.f32 %v1629, %v1723
  %v1725 = vpop.f32.mrb[0].mxu0
  %1726 = vmatprep.mubr.bf16.mxu0 0
  %1727 = vmatmul.mubr.bf16.gmra.mrb[0].mxu0 %v1580
  %v1728 = vpop.f32.mrb[0].mxu0
  %v1729 = vadd.f32 %v1629, %v1728
  %v1730 = vpop.f32.mrb[0].mxu0
  %v1731 = vpop.f32.mrb[0].mxu0
  %v1732 = vadd.f32 %v1629, %v1731
  %v1733 = vpop.f32.mrb[0].mxu0
  %1734 = vmatprep.mubr.bf16.mxu0 0
  %1735 = vmatmul.mubr.bf16.gmra.mrb[0].mxu0 %v1581
  %v1736 = vpop.f32.mrb[0].mxu0
  %v1737 = vadd.f32 %v1629, %v1736
  %v1738 = vpop.f32.mrb[0].mxu0
  %v1739 = vpop.f32.mrb[0].mxu0
  %v1740 = vadd.f32 %v1629, %v1739
  %v1741 = vpop.f32.mrb[0].mxu0
  %1742 = vmatprep.mubr.bf16.mxu0 0
  %1743 = vmatmul.mubr.bf16.gmra.mrb[0].mxu0 %v1582
  %v1744 = vpop.f32.mrb[0].mxu0
  %v1745 = vadd.f32 %v1629, %v1744
  %v1746 = vpop.f32.mrb[0].mxu0
  %v1747 = vpop.f32.mrb[0].mxu0
  %v1748 = vadd.f32 %v1629, %v1747
  %v1749 = vpop.f32.mrb[0].mxu0
  %1750 = vmatprep.mubr.bf16.mxu0 0
  %1751 = vmatmul.mubr.bf16.gmra.mrb[0].mxu0 %v1583
  %v1752 = vpop.f32.mrb[0].mxu0
  %v1753 = vadd.f32 %v1629, %v1752
  %v1754 = vpop.f32.mrb[0].mxu0
  %v1755 = vpop.f32.mrb[0].mxu0
  %v1756 = vadd.f32 %v1629, %v1755
  %v1757 = vpop.f32.mrb[0].mxu0
  %1758 = vmatprep.mubr.bf16.mxu0 0
  %1759 = vmatmul.mubr.bf16.gmra.mrb[0].mxu0 %v1584
  %v1760 = vpop.f32.mrb[0].mxu0
  %v1761 = vadd.f32 %v1629, %v1760
  %v1762 = vpop.f32.mrb[0].mxu0
  %v1763 = vpop.f32.mrb[0].mxu0
  %v1764 = vadd.f32 %v1629, %v1763
  %v1765 = vpop.f32.mrb[0].mxu0
  %1766 = vmatprep.mubr.bf16.mxu0 0
  %1767 = vmatmul.mubr.bf16.gmra.mrb[0].mxu0 %v1585
  %v1768 = vpop.f32.mrb[0].mxu0
  %v1769 = vadd.f32 %v1629, %v1768
  %v1770 = vpop.f32.mrb[0].mxu0
  %v1771 = vpop.f32.mrb[0].mxu0
  %v1772 = vadd.f32 %v1629, %v1771
  %v1773 = vpop.f32.mrb[0].mxu0
  %1774 = vmatprep.mubr.bf16.mxu0 0
  %1775 = vmatmul.mubr.bf16.gmra.mrb[0].mxu0 %v1586
  %v1776 = vpop.f32.mrb[0].mxu0
  %v1777 = vadd.f32 %v1629, %v1776
  %v1778 = vpop.f32.mrb[0].mxu0
  %v1779 = vpop.f32.mrb[0].mxu0
  %v1780 = vadd.f32 %v1629, %v1779
  %v1781 = vpop.f32.mrb[0].mxu0
  %1782 = vmatprep.mubr.bf16.mxu0 0
  %1783 = vmatmul.mubr.bf16.gmra.mrb[0].mxu0 %v1587
  %v1784 = vpop.f32.mrb[0].mxu0
  %v1785 = vadd.f32 %v1629, %v1784
  %v1786 = vpop.f32.mrb[0].mxu0
  %v1787 = vpop.f32.mrb[0].mxu0
  %v1788 = vadd.f32 %v1629, %v1787
  %v1789 = vpop.f32.mrb[0].mxu0
  %1790 = vmatprep.mubr.bf16.mxu0 0
  %1791 = vmatmul.mubr.bf16.gmra.mrb[0].mxu0 %v1588
  %v1792 = vpop.f32.mrb[0].mxu0
  %v1793 = vadd.f32 %v1629, %v1792
  %v1794 = vpop.f32.mrb[0].mxu0
  %v1795 = vpop.f32.mrb[0].mxu0
  %v1796 = vadd.f32 %v1629, %v1795
  %v1797 = vpop.f32.mrb[0].mxu0
  %1798 = vmatprep.mubr.bf16.mxu0 0
  %1799 = vmatmul.mubr.bf16.gmra.mrb[0].mxu0 %v1589
  %v1800 = vpop.f32.mrb[0].mxu0
  %v1801 = vadd.f32 %v1629, %v1800
  %v1802 = vpop.f32.mrb[0].mxu0
  %v1803 = vpop.f32.mrb[0].mxu0
  %v1804 = vadd.f32 %v1629, %v1803
  %v1805 = vpop.f32.mrb[0].mxu0
  %1806 = vmatprep.mubr.bf16.mxu0 0
  %1807 = vmatmul.mubr.bf16.gmra.mrb[0].mxu0 %v1590
  %v1808 = vpop.f32.mrb[0].mxu0
  %v1809 = vadd.f32 %v1629, %v1808
  %v1810 = vpop.f32.mrb[0].mxu0
  %v1811 = vpop.f32.mrb[0].mxu0
  %v1812 = vadd.f32 %v1629, %v1811
  %v1813 = vpop.f32.mrb[0].mxu0
  %1814 = vmatprep.mubr.bf16.mxu0 0
  %1815 = vmatmul.mubr.bf16.gmra.mrb[0].mxu0 %v1591
  %v1816 = vpop.f32.mrb[0].mxu0
  %v1817 = vadd.f32 %v1629, %v1816
  %v1818 = vpop.f32.mrb[0].mxu0
  %v1819 = vpop.f32.mrb[0].mxu0
  %v1820 = vadd.f32 %v1629, %v1819
  %v1821 = vpop.f32.mrb[0].mxu0
  %1822 = vmatprep.mubr.bf16.mxu0 0
  %1823 = vmatmul.mubr.bf16.gmra.mrb[0].mxu0 %v1592
  %v1824 = vpop.f32.mrb[0].mxu0
  %v1825 = vadd.f32 %v1629, %v1824
  %v1826 = vpop.f32.mrb[0].mxu0
  %v1827 = vpop.f32.mrb[0].mxu0
  %v1828 = vadd.f32 %v1629, %v1827
  %v1829 = vpop.f32.mrb[0].mxu0
  %1830 = vmatprep.mubr.bf16.mxu0 0
  %1831 = vmatmul.mubr.bf16.gmra.mrb[0].mxu0 %v1593
  %v1832 = vpop.f32.mrb[0].mxu0
  %v1833 = vadd.f32 %v1629, %v1832
  %v1834 = vpop.f32.mrb[0].mxu0
  %v1835 = vpop.f32.mrb[0].mxu0
  %v1836 = vadd.f32 %v1629, %v1835
  %v1837 = vpop.f32.mrb[0].mxu0
  %1838 = vmatprep.mubr.bf16.mxu0 0
  %1839 = vmatmul.mubr.bf16.gmra.mrb[0].mxu0 %v1594
  %v1840 = vpop.f32.mrb[0].mxu0
  %v1841 = vadd.f32 %v1629, %v1840
  %v1842 = vpop.f32.mrb[0].mxu0
  %v1843 = vpop.f32.mrb[0].mxu0
  %v1844 = vadd.f32 %v1629, %v1843
  %v1845 = vpop.f32.mrb[0].mxu0
  %1846 = vmatprep.mubr.bf16.mxu0 0
  %1847 = vmatmul.mubr.bf16.gmra.mrb[0].mxu0 %v1595
  %v1848 = vpop.f32.mrb[0].mxu0
  %v1849 = vadd.f32 %v1629, %v1848
  %v1850 = vpop.f32.mrb[0].mxu0
  %v1851 = vpop.f32.mrb[0].mxu0
  %v1852 = vadd.f32 %v1629, %v1851
  %v1853 = vpop.f32.mrb[0].mxu0
  %1854 = vmatprep.mubr.bf16.mxu0 0
  %1855 = vmatmul.mubr.bf16.gmra.mrb[0].mxu0 %v1596
  %v1856 = vpop.f32.mrb[0].mxu0
  %v1857 = vadd.f32 %v1629, %v1856
  %v1858 = vpop.f32.mrb[0].mxu0
  %v1859 = vpop.f32.mrb[0].mxu0
  %v1860 = vadd.f32 %v1629, %v1859
  %v1861 = vpop.f32.mrb[0].mxu0
  %1862 = vmatprep.mubr.bf16.mxu0 0
  %1863 = vmatmul.mubr.bf16.gmra.mrb[0].mxu0 %v1597
  %v1864 = vpop.f32.mrb[0].mxu0
  %v1865 = vadd.f32 %v1629, %v1864
  %v1866 = vpop.f32.mrb[0].mxu0
  %v1867 = vpop.f32.mrb[0].mxu0
  %v1868 = vadd.f32 %v1629, %v1867
  %v1869 = vpop.f32.mrb[0].mxu0
  %1870 = vmatprep.mubr.bf16.mxu0 0
  %1871 = vmatmul.mubr.bf16.gmra.mrb[0].mxu0 %v1598
  %v1872 = vpop.f32.mrb[0].mxu0
  %v1873 = vadd.f32 %v1629, %v1872
  %v1874 = vpop.f32.mrb[0].mxu0
  %v1875 = vpop.f32.mrb[0].mxu0
  %v1876 = vadd.f32 %v1629, %v1875
  %v1877 = vpop.f32.mrb[0].mxu0
  %1878 = vmatprep.mubr.bf16.mxu0 0
  %1879 = vmatmul.mubr.bf16.gmra.mrb[0].mxu0 %v1599
  %v1880 = vpop.f32.mrb[0].mxu0
  %v1881 = vadd.f32 %v1629, %v1880
  %v1882 = vpop.f32.mrb[0].mxu0
  %v1883 = vpop.f32.mrb[0].mxu0
  %v1884 = vadd.f32 %v1629, %v1883
  %v1885 = vpop.f32.mrb[0].mxu0
  %1886 = vmatprep.mubr.bf16.mxu0 0
  %1887 = vmatmul.mubr.bf16.gmra.mrb[0].mxu0 %v1600
  %v1888 = vpop.f32.mrb[0].mxu0
  %v1889 = vadd.f32 %v1629, %v1888
  %v1890 = vpop.f32.mrb[0].mxu0
  %v1891 = vpop.f32.mrb[0].mxu0
  %v1892 = vadd.f32 %v1629, %v1891
  %v1893 = vpop.f32.mrb[0].mxu0
  %1894 = vmatprep.mubr.bf16.mxu0 0
  %1895 = vmatmul.mubr.bf16.gmra.mrb[0].mxu0 %v1601
  %v1896 = vpop.f32.mrb[0].mxu0
  %v1897 = vadd.f32 %v1629, %v1896
  %v1898 = vpop.f32.mrb[0].mxu0
  %v1899 = vpop.f32.mrb[0].mxu0
  %v1900 = vadd.f32 %v1629, %v1899
  %v1901 = vpop.f32.mrb[0].mxu0
  %1902 = vmatprep.mubr.bf16.mxu0 0
  %1903 = vmatmul.mubr.bf16.gmra.mrb[0].mxu0 %v1602
  %v1904 = vpop.f32.mrb[0].mxu0
  %v1905 = vadd.f32 %v1629, %v1904
  %v1906 = vpop.f32.mrb[0].mxu0
  %v1907 = vpop.f32.mrb[0].mxu0
  %v1908 = vadd.f32 %v1629, %v1907
  %v1909 = vpop.f32.mrb[0].mxu0
  %1910 = vmatprep.mubr.bf16.mxu0 0
  %1911 = vmatmul.mubr.bf16.gmra.mrb[0].mxu0 %v1603
  %v1912 = vpop.f32.mrb[0].mxu0
  %v1913 = vadd.f32 %v1629, %v1912
  %v1914 = vpop.f32.mrb[0].mxu0
  %v1915 = vpop.f32.mrb[0].mxu0
  %v1916 = vadd.f32 %v1629, %v1915
  %v1917 = vpop.f32.mrb[0].mxu0
  %1918 = vmatprep.mubr.bf16.mxu0 0
  %1919 = vmatmul.mubr.bf16.gmra.mrb[0].mxu0 %v1604
  %v1920 = vpop.f32.mrb[0].mxu0
  %v1921 = vadd.f32 %v1629, %v1920
  %v1922 = vpop.f32.mrb[0].mxu0
  %v1923 = vpop.f32.mrb[0].mxu0
  %v1924 = vadd.f32 %v1629, %v1923
  %v1925 = vpop.f32.mrb[0].mxu0
  %1926 = vmatprep.mubr.bf16.mxu0 0
  %1927 = vmatmul.mubr.bf16.gmra.mrb[0].mxu0 %v1605
  %v1928 = vpop.f32.mrb[0].mxu0
  %v1929 = vadd.f32 %v1629, %v1928
  %v1930 = vpop.f32.mrb[0].mxu0
  %v1931 = vpop.f32.mrb[0].mxu0
  %v1932 = vadd.f32 %v1629, %v1931
  %v1933 = vpop.f32.mrb[0].mxu0
  %1934 = vmatprep.mubr.bf16.mxu0 0
  %1935 = vmatmul.mubr.bf16.gmra.mrb[0].mxu0 %v1606
  %v1936 = vpop.f32.mrb[0].mxu0
  %v1937 = vadd.f32 %v1629, %v1936
  %v1938 = vpop.f32.mrb[0].mxu0
  %v1939 = vpop.f32.mrb[0].mxu0
  %v1940 = vadd.f32 %v1629, %v1939
  %v1941 = vpop.f32.mrb[0].mxu0
  %1942 = vmatprep.mubr.bf16.mxu0 0
  %1943 = vmatmul.mubr.bf16.gmra.mrb[0].mxu0 %v1607
  %v1944 = vpop.f32.mrb[0].mxu0
  %v1945 = vadd.f32 %v1629, %v1944
  %v1946 = vpop.f32.mrb[0].mxu0
  %v1947 = vpop.f32.mrb[0].mxu0
  %v1948 = vadd.f32 %v1629, %v1947
  %v1949 = vpop.f32.mrb[0].mxu0
  %1950 = vmatprep.mubr.bf16.mxu0 0
  %1951 = vmatmul.mubr.bf16.gmra.mrb[0].mxu0 %v1608
  %v1952 = vpop.f32.mrb[0].mxu0
  %v1953 = vadd.f32 %v1629, %v1952
  %v1954 = vpop.f32.mrb[0].mxu0
  %v1955 = vpop.f32.mrb[0].mxu0
  %v1956 = vadd.f32 %v1629, %v1955
  %v1957 = vpop.f32.mrb[0].mxu0
  %1958 = vmatprep.mubr.bf16.mxu0 0
  %1959 = vmatmul.mubr.bf16.gmra.mrb[0].mxu0 %v1609
  %v1960 = vpop.f32.mrb[0].mxu0
  %v1961 = vadd.f32 %v1629, %v1960
  %v1962 = vpop.f32.mrb[0].mxu0
  %v1963 = vpop.f32.mrb[0].mxu0
  %v1964 = vadd.f32 %v1629, %v1963
  %v1965 = vpop.f32.mrb[0].mxu0
  %1966 = vdwg.mxu0
  %v1967 = vmax.f32 %v1713, 0.0
  %v1968 = vmax.f32 %v1716, 0.0
  %v1969 = vmax.f32 %v1721, 0.0
  %v1970 = vmax.f32 %v1724, 0.0
  %v1971 = vmax.f32 %v1729, 0.0
  %v1972 = vmax.f32 %v1732, 0.0
  %v1973 = vmax.f32 %v1737, 0.0
  %v1974 = vmax.f32 %v1740, 0.0
  %v1975 = vmax.f32 %v1745, 0.0
  %v1976 = vmax.f32 %v1748, 0.0
  %v1977 = vmax.f32 %v1753, 0.0
  %v1978 = vmax.f32 %v1756, 0.0
  %v1979 = vmax.f32 %v1761, 0.0
  %v1980 = vmax.f32 %v1764, 0.0
  %v1981 = vmax.f32 %v1769, 0.0
  %v1982 = vmax.f32 %v1772, 0.0
  %v1983 = vmax.f32 %v1777, 0.0
  %v1984 = vmax.f32 %v1780, 0.0
  %v1985 = vmax.f32 %v1785, 0.0
  %v1986 = vmax.f32 %v1788, 0.0
  %v1987 = vmax.f32 %v1793, 0.0
  %v1988 = vmax.f32 %v1796, 0.0
  %v1989 = vmax.f32 %v1801, 0.0
  %v1990 = vmax.f32 %v1804, 0.0
  %v1991 = vmax.f32 %v1809, 0.0
  %v1992 = vmax.f32 %v1812, 0.0
  %v1993 = vmax.f32 %v1817, 0.0
  %v1994 = vmax.f32 %v1820, 0.0
  %v1995 = vmax.f32 %v1825, 0.0
  %v1996 = vmax.f32 %v1828, 0.0
  %v1997 = vmax.f32 %v1833, 0.0
  %v1998 = vmax.f32 %v1836, 0.0
  %v1999 = vmax.f32 %v1841, 0.0
  %v2000 = vmax.f32 %v1844, 0.0
  %v2001 = vmax.f32 %v1849, 0.0
  %v2002 = vmax.f32 %v1852, 0.0
  %v2003 = vmax.f32 %v1857, 0.0
  %v2004 = vmax.f32 %v1860, 0.0
  %v2005 = vmax.f32 %v1865, 0.0
  %v2006 = vmax.f32 %v1868, 0.0
  %v2007 = vmax.f32 %v1873, 0.0
  %v2008 = vmax.f32 %v1876, 0.0
  %v2009 = vmax.f32 %v1881, 0.0
  %v2010 = vmax.f32 %v1884, 0.0
  %v2011 = vmax.f32 %v1889, 0.0
  %v2012 = vmax.f32 %v1892, 0.0
  %v2013 = vmax.f32 %v1897, 0.0
  %v2014 = vmax.f32 %v1900, 0.0
  %v2015 = vmax.f32 %v1905, 0.0
  %v2016 = vmax.f32 %v1908, 0.0
  %v2017 = vmax.f32 %v1913, 0.0
  %v2018 = vmax.f32 %v1916, 0.0
  %v2019 = vmax.f32 %v1921, 0.0
  %v2020 = vmax.f32 %v1924, 0.0
  %v2021 = vmax.f32 %v1929, 0.0
  %v2022 = vmax.f32 %v1932, 0.0
  %v2023 = vmax.f32 %v1937, 0.0
  %v2024 = vmax.f32 %v1940, 0.0
  %v2025 = vmax.f32 %v1945, 0.0
  %v2026 = vmax.f32 %v1948, 0.0
  %v2027 = vmax.f32 %v1953, 0.0
  %v2028 = vmax.f32 %v1956, 0.0
  %v2029 = vmax.f32 %v1961, 0.0
  %v2030 = vmax.f32 %v1964, 0.0
  %v2031 = vpack.c.bf16 %v1968, %v1967
  %v2032 = vpack.c.bf16 %v1970, %v1969
  %v2033 = vpack.c.bf16 %v1972, %v1971
  %v2034 = vpack.c.bf16 %v1974, %v1973
  %v2035 = vpack.c.bf16 %v1976, %v1975
  %v2036 = vpack.c.bf16 %v1978, %v1977
  %v2037 = vpack.c.bf16 %v1980, %v1979
  %v2038 = vpack.c.bf16 %v1982, %v1981
  %v2039 = vpack.c.bf16 %v1984, %v1983
  %v2040 = vpack.c.bf16 %v1986, %v1985
  %v2041 = vpack.c.bf16 %v1988, %v1987
  %v2042 = vpack.c.bf16 %v1990, %v1989
  %v2043 = vpack.c.bf16 %v1992, %v1991
  %v2044 = vpack.c.bf16 %v1994, %v1993
  %v2045 = vpack.c.bf16 %v1996, %v1995
  %v2046 = vpack.c.bf16 %v1998, %v1997
  %v2047 = vpack.c.bf16 %v2000, %v1999
  %v2048 = vpack.c.bf16 %v2002, %v2001
  %v2049 = vpack.c.bf16 %v2004, %v2003
  %v2050 = vpack.c.bf16 %v2006, %v2005
  %v2051 = vpack.c.bf16 %v2008, %v2007
  %v2052 = vpack.c.bf16 %v2010, %v2009
  %v2053 = vpack.c.bf16 %v2012, %v2011
  %v2054 = vpack.c.bf16 %v2014, %v2013
  %v2055 = vpack.c.bf16 %v2016, %v2015
  %v2056 = vpack.c.bf16 %v2018, %v2017
  %v2057 = vpack.c.bf16 %v2020, %v2019
  %v2058 = vpack.c.bf16 %v2022, %v2021
  %v2059 = vpack.c.bf16 %v2024, %v2023
  %v2060 = vpack.c.bf16 %v2026, %v2025
  %v2061 = vpack.c.bf16 %v2028, %v2027
  %v2062 = vpack.c.bf16 %v2030, %v2029
  %s2063 = scalar_lea.vmem %s4, 64
  %v2064 = vld [vmem:[%s2063] sm:$0xf]
  %v2065 = vld [vmem:[%s2063 + $0x4] sm:$0xf]
  %v2066 = vld [vmem:[%s2063 + $0x8] sm:$0xf]
  %v2067 = vld [vmem:[%s2063 + $0xc] sm:$0xf]
  %v2068 = vld [vmem:[%s2063 + $0x10] sm:$0xf]
  %v2069 = vld [vmem:[%s2063 + $0x14] sm:$0xf]
  %v2070 = vld [vmem:[%s2063 + $0x18] sm:$0xf]
  %v2071 = vld [vmem:[%s2063 + $0x1c] sm:$0xf]
  %v2072 = vld [vmem:[%s2063 + $0x20] sm:$0xf]
  %v2073 = vld [vmem:[%s2063 + $0x24] sm:$0xf]
  %v2074 = vld [vmem:[%s2063 + $0x28] sm:$0xf]
  %v2075 = vld [vmem:[%s2063 + $0x2c] sm:$0xf]
  %v2076 = vld [vmem:[%s2063 + $0x30] sm:$0xf]
  %v2077 = vld [vmem:[%s2063 + $0x34] sm:$0xf]
  %v2078 = vld [vmem:[%s2063 + $0x38] sm:$0xf]
  %v2079 = vld [vmem:[%s2063 + $0x3c] sm:$0xf]
  %v2080 = vlaneseq
  %v2081 = vshrl.u32 %v2080, 7
  %v2082 = vsub.s32 0, %v2081
  %v2083 = vrot.slane %v26, %v2082
  %v2100 = vunpack.c.l.b16 %v2064
  %v2101 = vunpack.c.l.b16 %v2065
  %v2102 = vunpack.c.l.b16 %v2066
  %v2103 = vunpack.c.l.b16 %v2067
  %v2104 = vunpack.c.l.b16 %v2068
  %v2105 = vunpack.c.l.b16 %v2069
  %v2106 = vunpack.c.l.b16 %v2070
  %v2107 = vunpack.c.l.b16 %v2071
  %v2108 = vunpack.c.l.b16 %v2072
  %v2109 = vunpack.c.l.b16 %v2073
  %v2110 = vunpack.c.l.b16 %v2074
  %v2111 = vunpack.c.l.b16 %v2075
  %v2112 = vunpack.c.l.b16 %v2076
  %v2113 = vunpack.c.l.b16 %v2077
  %v2114 = vunpack.c.l.b16 %v2078
  %v2115 = vunpack.c.l.b16 %v2079
  %v2116 = vpack.c.b16 %v2101, %v2100
  %v2117 = vpack.c.b16 %v2103, %v2102
  %v2118 = vpack.c.b16 %v2105, %v2104
  %v2119 = vpack.c.b16 %v2107, %v2106
  %v2120 = vpack.c.b16 %v2109, %v2108
  %v2121 = vpack.c.b16 %v2111, %v2110
  %v2122 = vpack.c.b16 %v2113, %v2112
  %v2123 = vpack.c.b16 %v2115, %v2114
  %2132 = vmatprep.subr.bf16.mxu0 0
  %2133 = vmatpush1.bf16.msra.mxu0 %v2116
  %2134 = vmatprep.subr.bf16.mxu0 0
  %2135 = vmatpush1.bf16.msra.mxu0 %v2117
  %2136 = vmatprep.subr.bf16.mxu0 0
  %2137 = vmatpush1.bf16.msra.mxu0 %v2118
  %2138 = vmatprep.subr.bf16.mxu0 0
  %2139 = vmatpush1.bf16.msra.mxu0 %v2119
  %2140 = vmatprep.subr.bf16.mxu0 0
  %2141 = vmatpush1.bf16.msra.mxu0 %v2120
  %2142 = vmatprep.subr.bf16.mxu0 0
  %2143 = vmatpush1.bf16.msra.mxu0 %v2121
  %2144 = vmatprep.subr.bf16.mxu0 0
  %2145 = vmatpush1.bf16.msra.mxu0 %v2122
  %2146 = vmatprep.subr.bf16.mxu0 0
  %2147 = vmatpush1.bf16.msra.mxu0 %v2123
  %2148 = vmatprep.subr.bf16.mxu0 0
  %2149 = vmatpush1.bf16.msra.mxu0 0
  %2150 = vmatprep.subr.bf16.mxu0 0
  %2151 = vmatpush1.bf16.msra.mxu0 0
  %2152 = vmatprep.subr.bf16.mxu0 0
  %2153 = vmatpush1.bf16.msra.mxu0 0
  %2154 = vmatprep.subr.bf16.mxu0 0
  %2155 = vmatpush1.bf16.msra.mxu0 0
  %2156 = vmatprep.subr.bf16.mxu0 0
  %2157 = vmatpush1.bf16.msra.mxu0 0
  %2158 = vmatprep.subr.bf16.mxu0 0
  %2159 = vmatpush1.bf16.msra.mxu0 0
  %2160 = vmatprep.subr.bf16.mxu0 0
  %2161 = vmatpush1.bf16.msra.mxu0 0
  %2162 = vmatprep.subr.bf16.mxu0 0
  %2163 = vmatpush1.bf16.msra.mxu0 0
  %2164 = vmatprep.mubr.bf16.mxu0 0
  %2165 = vmatmul.mubr.bf16.gmra.mrb[0].mxu0 %v2031
  %v2166 = vpop.f32.mrb[0].mxu0
  %v2167 = vadd.f32 %v2083, %v2166
  %v2168 = vpop.f32.mrb[0].mxu0
  %v2169 = vpop.f32.mrb[0].mxu0
  %v2170 = vadd.f32 %v2083, %v2169
  %v2171 = vpop.f32.mrb[0].mxu0
  %2172 = vmatprep.mubr.bf16.mxu0 0
  %2173 = vmatmul.mubr.bf16.gmra.mrb[0].mxu0 %v2032
  %v2174 = vpop.f32.mrb[0].mxu0
  %v2175 = vadd.f32 %v2083, %v2174
  %v2176 = vpop.f32.mrb[0].mxu0
  %v2177 = vpop.f32.mrb[0].mxu0
  %v2178 = vadd.f32 %v2083, %v2177
  %v2179 = vpop.f32.mrb[0].mxu0
  %2180 = vmatprep.mubr.bf16.mxu0 0
  %2181 = vmatmul.mubr.bf16.gmra.mrb[0].mxu0 %v2033
  %v2182 = vpop.f32.mrb[0].mxu0
  %v2183 = vadd.f32 %v2083, %v2182
  %v2184 = vpop.f32.mrb[0].mxu0
  %v2185 = vpop.f32.mrb[0].mxu0
  %v2186 = vadd.f32 %v2083, %v2185
  %v2187 = vpop.f32.mrb[0].mxu0
  %2188 = vmatprep.mubr.bf16.mxu0 0
  %2189 = vmatmul.mubr.bf16.gmra.mrb[0].mxu0 %v2034
  %v2190 = vpop.f32.mrb[0].mxu0
  %v2191 = vadd.f32 %v2083, %v2190
  %v2192 = vpop.f32.mrb[0].mxu0
  %v2193 = vpop.f32.mrb[0].mxu0
  %v2194 = vadd.f32 %v2083, %v2193
  %v2195 = vpop.f32.mrb[0].mxu0
  %2196 = vmatprep.mubr.bf16.mxu0 0
  %2197 = vmatmul.mubr.bf16.gmra.mrb[0].mxu0 %v2035
  %v2198 = vpop.f32.mrb[0].mxu0
  %v2199 = vadd.f32 %v2083, %v2198
  %v2200 = vpop.f32.mrb[0].mxu0
  %v2201 = vpop.f32.mrb[0].mxu0
  %v2202 = vadd.f32 %v2083, %v2201
  %v2203 = vpop.f32.mrb[0].mxu0
  %2204 = vmatprep.mubr.bf16.mxu0 0
  %2205 = vmatmul.mubr.bf16.gmra.mrb[0].mxu0 %v2036
  %v2206 = vpop.f32.mrb[0].mxu0
  %v2207 = vadd.f32 %v2083, %v2206
  %v2208 = vpop.f32.mrb[0].mxu0
  %v2209 = vpop.f32.mrb[0].mxu0
  %v2210 = vadd.f32 %v2083, %v2209
  %v2211 = vpop.f32.mrb[0].mxu0
  %2212 = vmatprep.mubr.bf16.mxu0 0
  %2213 = vmatmul.mubr.bf16.gmra.mrb[0].mxu0 %v2037
  %v2214 = vpop.f32.mrb[0].mxu0
  %v2215 = vadd.f32 %v2083, %v2214
  %v2216 = vpop.f32.mrb[0].mxu0
  %v2217 = vpop.f32.mrb[0].mxu0
  %v2218 = vadd.f32 %v2083, %v2217
  %v2219 = vpop.f32.mrb[0].mxu0
  %2220 = vmatprep.mubr.bf16.mxu0 0
  %2221 = vmatmul.mubr.bf16.gmra.mrb[0].mxu0 %v2038
  %v2222 = vpop.f32.mrb[0].mxu0
  %v2223 = vadd.f32 %v2083, %v2222
  %v2224 = vpop.f32.mrb[0].mxu0
  %v2225 = vpop.f32.mrb[0].mxu0
  %v2226 = vadd.f32 %v2083, %v2225
  %v2227 = vpop.f32.mrb[0].mxu0
  %2228 = vmatprep.mubr.bf16.mxu0 0
  %2229 = vmatmul.mubr.bf16.gmra.mrb[0].mxu0 %v2039
  %v2230 = vpop.f32.mrb[0].mxu0
  %v2231 = vadd.f32 %v2083, %v2230
  %v2232 = vpop.f32.mrb[0].mxu0
  %v2233 = vpop.f32.mrb[0].mxu0
  %v2234 = vadd.f32 %v2083, %v2233
  %v2235 = vpop.f32.mrb[0].mxu0
  %2236 = vmatprep.mubr.bf16.mxu0 0
  %2237 = vmatmul.mubr.bf16.gmra.mrb[0].mxu0 %v2040
  %v2238 = vpop.f32.mrb[0].mxu0
  %v2239 = vadd.f32 %v2083, %v2238
  %v2240 = vpop.f32.mrb[0].mxu0
  %v2241 = vpop.f32.mrb[0].mxu0
  %v2242 = vadd.f32 %v2083, %v2241
  %v2243 = vpop.f32.mrb[0].mxu0
  %2244 = vmatprep.mubr.bf16.mxu0 0
  %2245 = vmatmul.mubr.bf16.gmra.mrb[0].mxu0 %v2041
  %v2246 = vpop.f32.mrb[0].mxu0
  %v2247 = vadd.f32 %v2083, %v2246
  %v2248 = vpop.f32.mrb[0].mxu0
  %v2249 = vpop.f32.mrb[0].mxu0
  %v2250 = vadd.f32 %v2083, %v2249
  %v2251 = vpop.f32.mrb[0].mxu0
  %2252 = vmatprep.mubr.bf16.mxu0 0
  %2253 = vmatmul.mubr.bf16.gmra.mrb[0].mxu0 %v2042
  %v2254 = vpop.f32.mrb[0].mxu0
  %v2255 = vadd.f32 %v2083, %v2254
  %v2256 = vpop.f32.mrb[0].mxu0
  %v2257 = vpop.f32.mrb[0].mxu0
  %v2258 = vadd.f32 %v2083, %v2257
  %v2259 = vpop.f32.mrb[0].mxu0
  %2260 = vmatprep.mubr.bf16.mxu0 0
  %2261 = vmatmul.mubr.bf16.gmra.mrb[0].mxu0 %v2043
  %v2262 = vpop.f32.mrb[0].mxu0
  %v2263 = vadd.f32 %v2083, %v2262
  %v2264 = vpop.f32.mrb[0].mxu0
  %v2265 = vpop.f32.mrb[0].mxu0
  %v2266 = vadd.f32 %v2083, %v2265
  %v2267 = vpop.f32.mrb[0].mxu0
  %2268 = vmatprep.mubr.bf16.mxu0 0
  %2269 = vmatmul.mubr.bf16.gmra.mrb[0].mxu0 %v2044
  %v2270 = vpop.f32.mrb[0].mxu0
  %v2271 = vadd.f32 %v2083, %v2270
  %v2272 = vpop.f32.mrb[0].mxu0
  %v2273 = vpop.f32.mrb[0].mxu0
  %v2274 = vadd.f32 %v2083, %v2273
  %v2275 = vpop.f32.mrb[0].mxu0
  %2276 = vmatprep.mubr.bf16.mxu0 0
  %2277 = vmatmul.mubr.bf16.gmra.mrb[0].mxu0 %v2045
  %v2278 = vpop.f32.mrb[0].mxu0
  %v2279 = vadd.f32 %v2083, %v2278
  %v2280 = vpop.f32.mrb[0].mxu0
  %v2281 = vpop.f32.mrb[0].mxu0
  %v2282 = vadd.f32 %v2083, %v2281
  %v2283 = vpop.f32.mrb[0].mxu0
  %2284 = vmatprep.mubr.bf16.mxu0 0
  %2285 = vmatmul.mubr.bf16.gmra.mrb[0].mxu0 %v2046
  %v2286 = vpop.f32.mrb[0].mxu0
  %v2287 = vadd.f32 %v2083, %v2286
  %v2288 = vpop.f32.mrb[0].mxu0
  %v2289 = vpop.f32.mrb[0].mxu0
  %v2290 = vadd.f32 %v2083, %v2289
  %v2291 = vpop.f32.mrb[0].mxu0
  %2292 = vmatprep.mubr.bf16.mxu0 0
  %2293 = vmatmul.mubr.bf16.gmra.mrb[0].mxu0 %v2047
  %v2294 = vpop.f32.mrb[0].mxu0
  %v2295 = vadd.f32 %v2083, %v2294
  %v2296 = vpop.f32.mrb[0].mxu0
  %v2297 = vpop.f32.mrb[0].mxu0
  %v2298 = vadd.f32 %v2083, %v2297
  %v2299 = vpop.f32.mrb[0].mxu0
  %2300 = vmatprep.mubr.bf16.mxu0 0
  %2301 = vmatmul.mubr.bf16.gmra.mrb[0].mxu0 %v2048
  %v2302 = vpop.f32.mrb[0].mxu0
  %v2303 = vadd.f32 %v2083, %v2302
  %v2304 = vpop.f32.mrb[0].mxu0
  %v2305 = vpop.f32.mrb[0].mxu0
  %v2306 = vadd.f32 %v2083, %v2305
  %v2307 = vpop.f32.mrb[0].mxu0
  %2308 = vmatprep.mubr.bf16.mxu0 0
  %2309 = vmatmul.mubr.bf16.gmra.mrb[0].mxu0 %v2049
  %v2310 = vpop.f32.mrb[0].mxu0
  %v2311 = vadd.f32 %v2083, %v2310
  %v2312 = vpop.f32.mrb[0].mxu0
  %v2313 = vpop.f32.mrb[0].mxu0
  %v2314 = vadd.f32 %v2083, %v2313
  %v2315 = vpop.f32.mrb[0].mxu0
  %2316 = vmatprep.mubr.bf16.mxu0 0
  %2317 = vmatmul.mubr.bf16.gmra.mrb[0].mxu0 %v2050
  %v2318 = vpop.f32.mrb[0].mxu0
  %v2319 = vadd.f32 %v2083, %v2318
  %v2320 = vpop.f32.mrb[0].mxu0
  %v2321 = vpop.f32.mrb[0].mxu0
  %v2322 = vadd.f32 %v2083, %v2321
  %v2323 = vpop.f32.mrb[0].mxu0
  %2324 = vmatprep.mubr.bf16.mxu0 0
  %2325 = vmatmul.mubr.bf16.gmra.mrb[0].mxu0 %v2051
  %v2326 = vpop.f32.mrb[0].mxu0
  %v2327 = vadd.f32 %v2083, %v2326
  %v2328 = vpop.f32.mrb[0].mxu0
  %v2329 = vpop.f32.mrb[0].mxu0
  %v2330 = vadd.f32 %v2083, %v2329
  %v2331 = vpop.f32.mrb[0].mxu0
  %2332 = vmatprep.mubr.bf16.mxu0 0
  %2333 = vmatmul.mubr.bf16.gmra.mrb[0].mxu0 %v2052
  %v2334 = vpop.f32.mrb[0].mxu0
  %v2335 = vadd.f32 %v2083, %v2334
  %v2336 = vpop.f32.mrb[0].mxu0
  %v2337 = vpop.f32.mrb[0].mxu0
  %v2338 = vadd.f32 %v2083, %v2337
  %v2339 = vpop.f32.mrb[0].mxu0
  %2340 = vmatprep.mubr.bf16.mxu0 0
  %2341 = vmatmul.mubr.bf16.gmra.mrb[0].mxu0 %v2053
  %v2342 = vpop.f32.mrb[0].mxu0
  %v2343 = vadd.f32 %v2083, %v2342
  %v2344 = vpop.f32.mrb[0].mxu0
  %v2345 = vpop.f32.mrb[0].mxu0
  %v2346 = vadd.f32 %v2083, %v2345
  %v2347 = vpop.f32.mrb[0].mxu0
  %2348 = vmatprep.mubr.bf16.mxu0 0
  %2349 = vmatmul.mubr.bf16.gmra.mrb[0].mxu0 %v2054
  %v2350 = vpop.f32.mrb[0].mxu0
  %v2351 = vadd.f32 %v2083, %v2350
  %v2352 = vpop.f32.mrb[0].mxu0
  %v2353 = vpop.f32.mrb[0].mxu0
  %v2354 = vadd.f32 %v2083, %v2353
  %v2355 = vpop.f32.mrb[0].mxu0
  %2356 = vmatprep.mubr.bf16.mxu0 0
  %2357 = vmatmul.mubr.bf16.gmra.mrb[0].mxu0 %v2055
  %v2358 = vpop.f32.mrb[0].mxu0
  %v2359 = vadd.f32 %v2083, %v2358
  %v2360 = vpop.f32.mrb[0].mxu0
  %v2361 = vpop.f32.mrb[0].mxu0
  %v2362 = vadd.f32 %v2083, %v2361
  %v2363 = vpop.f32.mrb[0].mxu0
  %2364 = vmatprep.mubr.bf16.mxu0 0
  %2365 = vmatmul.mubr.bf16.gmra.mrb[0].mxu0 %v2056
  %v2366 = vpop.f32.mrb[0].mxu0
  %v2367 = vadd.f32 %v2083, %v2366
  %v2368 = vpop.f32.mrb[0].mxu0
  %v2369 = vpop.f32.mrb[0].mxu0
  %v2370 = vadd.f32 %v2083, %v2369
  %v2371 = vpop.f32.mrb[0].mxu0
  %2372 = vmatprep.mubr.bf16.mxu0 0
  %2373 = vmatmul.mubr.bf16.gmra.mrb[0].mxu0 %v2057
  %v2374 = vpop.f32.mrb[0].mxu0
  %v2375 = vadd.f32 %v2083, %v2374
  %v2376 = vpop.f32.mrb[0].mxu0
  %v2377 = vpop.f32.mrb[0].mxu0
  %v2378 = vadd.f32 %v2083, %v2377
  %v2379 = vpop.f32.mrb[0].mxu0
  %2380 = vmatprep.mubr.bf16.mxu0 0
  %2381 = vmatmul.mubr.bf16.gmra.mrb[0].mxu0 %v2058
  %v2382 = vpop.f32.mrb[0].mxu0
  %v2383 = vadd.f32 %v2083, %v2382
  %v2384 = vpop.f32.mrb[0].mxu0
  %v2385 = vpop.f32.mrb[0].mxu0
  %v2386 = vadd.f32 %v2083, %v2385
  %v2387 = vpop.f32.mrb[0].mxu0
  %2388 = vmatprep.mubr.bf16.mxu0 0
  %2389 = vmatmul.mubr.bf16.gmra.mrb[0].mxu0 %v2059
  %v2390 = vpop.f32.mrb[0].mxu0
  %v2391 = vadd.f32 %v2083, %v2390
  %v2392 = vpop.f32.mrb[0].mxu0
  %v2393 = vpop.f32.mrb[0].mxu0
  %v2394 = vadd.f32 %v2083, %v2393
  %v2395 = vpop.f32.mrb[0].mxu0
  %2396 = vmatprep.mubr.bf16.mxu0 0
  %2397 = vmatmul.mubr.bf16.gmra.mrb[0].mxu0 %v2060
  %v2398 = vpop.f32.mrb[0].mxu0
  %v2399 = vadd.f32 %v2083, %v2398
  %v2400 = vpop.f32.mrb[0].mxu0
  %v2401 = vpop.f32.mrb[0].mxu0
  %v2402 = vadd.f32 %v2083, %v2401
  %v2403 = vpop.f32.mrb[0].mxu0
  %2404 = vmatprep.mubr.bf16.mxu0 0
  %2405 = vmatmul.mubr.bf16.gmra.mrb[0].mxu0 %v2061
  %v2406 = vpop.f32.mrb[0].mxu0
  %v2407 = vadd.f32 %v2083, %v2406
  %v2408 = vpop.f32.mrb[0].mxu0
  %v2409 = vpop.f32.mrb[0].mxu0
  %v2410 = vadd.f32 %v2083, %v2409
  %v2411 = vpop.f32.mrb[0].mxu0
  %2412 = vmatprep.mubr.bf16.mxu0 0
  %2413 = vmatmul.mubr.bf16.gmra.mrb[0].mxu0 %v2062
  %v2414 = vpop.f32.mrb[0].mxu0
  %v2415 = vadd.f32 %v2083, %v2414
  %v2416 = vpop.f32.mrb[0].mxu0
  %v2417 = vpop.f32.mrb[0].mxu0
  %v2418 = vadd.f32 %v2083, %v2417
  %v2419 = vpop.f32.mrb[0].mxu0
  %2420 = vdwg.mxu0
  %v2421 = vmax.f32 %v2167, 0.0
  %v2422 = vmax.f32 %v2170, 0.0
  %v2423 = vmax.f32 %v2175, 0.0
  %v2424 = vmax.f32 %v2178, 0.0
  %v2425 = vmax.f32 %v2183, 0.0
  %v2426 = vmax.f32 %v2186, 0.0
  %v2427 = vmax.f32 %v2191, 0.0
  %v2428 = vmax.f32 %v2194, 0.0
  %v2429 = vmax.f32 %v2199, 0.0
  %v2430 = vmax.f32 %v2202, 0.0
  %v2431 = vmax.f32 %v2207, 0.0
  %v2432 = vmax.f32 %v2210, 0.0
  %v2433 = vmax.f32 %v2215, 0.0
  %v2434 = vmax.f32 %v2218, 0.0
  %v2435 = vmax.f32 %v2223, 0.0
  %v2436 = vmax.f32 %v2226, 0.0
  %v2437 = vmax.f32 %v2231, 0.0
  %v2438 = vmax.f32 %v2234, 0.0
  %v2439 = vmax.f32 %v2239, 0.0
  %v2440 = vmax.f32 %v2242, 0.0
  %v2441 = vmax.f32 %v2247, 0.0
  %v2442 = vmax.f32 %v2250, 0.0
  %v2443 = vmax.f32 %v2255, 0.0
  %v2444 = vmax.f32 %v2258, 0.0
  %v2445 = vmax.f32 %v2263, 0.0
  %v2446 = vmax.f32 %v2266, 0.0
  %v2447 = vmax.f32 %v2271, 0.0
  %v2448 = vmax.f32 %v2274, 0.0
  %v2449 = vmax.f32 %v2279, 0.0
  %v2450 = vmax.f32 %v2282, 0.0
  %v2451 = vmax.f32 %v2287, 0.0
  %v2452 = vmax.f32 %v2290, 0.0
  %v2453 = vmax.f32 %v2295, 0.0
  %v2454 = vmax.f32 %v2298, 0.0
  %v2455 = vmax.f32 %v2303, 0.0
  %v2456 = vmax.f32 %v2306, 0.0
  %v2457 = vmax.f32 %v2311, 0.0
  %v2458 = vmax.f32 %v2314, 0.0
  %v2459 = vmax.f32 %v2319, 0.0
  %v2460 = vmax.f32 %v2322, 0.0
  %v2461 = vmax.f32 %v2327, 0.0
  %v2462 = vmax.f32 %v2330, 0.0
  %v2463 = vmax.f32 %v2335, 0.0
  %v2464 = vmax.f32 %v2338, 0.0
  %v2465 = vmax.f32 %v2343, 0.0
  %v2466 = vmax.f32 %v2346, 0.0
  %v2467 = vmax.f32 %v2351, 0.0
  %v2468 = vmax.f32 %v2354, 0.0
  %v2469 = vmax.f32 %v2359, 0.0
  %v2470 = vmax.f32 %v2362, 0.0
  %v2471 = vmax.f32 %v2367, 0.0
  %v2472 = vmax.f32 %v2370, 0.0
  %v2473 = vmax.f32 %v2375, 0.0
  %v2474 = vmax.f32 %v2378, 0.0
  %v2475 = vmax.f32 %v2383, 0.0
  %v2476 = vmax.f32 %v2386, 0.0
  %v2477 = vmax.f32 %v2391, 0.0
  %v2478 = vmax.f32 %v2394, 0.0
  %v2479 = vmax.f32 %v2399, 0.0
  %v2480 = vmax.f32 %v2402, 0.0
  %v2481 = vmax.f32 %v2407, 0.0
  %v2482 = vmax.f32 %v2410, 0.0
  %v2483 = vmax.f32 %v2415, 0.0
  %v2484 = vmax.f32 %v2418, 0.0
  %v2485 = vmax.f32 %v2421, %v2422
  %v2486 = vrot.slane %v2485, 4
  %v2487 = vmax.f32 %v2485, %v2486
  %v2488 = vrot.slane %v2487, 2
  %v2489 = vmax.f32 %v2487, %v2488
  %v2490 = vrot.slane %v2489, 1
  %v2491 = vmax.f32 %v2489, %v2490
  %v2492 = vmax.f32 %v2423, %v2424
  %v2493 = vrot.slane %v2492, 4
  %v2494 = vmax.f32 %v2492, %v2493
  %v2495 = vrot.slane %v2494, 2
  %v2496 = vmax.f32 %v2494, %v2495
  %v2497 = vrot.slane %v2496, 1
  %v2498 = vmax.f32 %v2496, %v2497
  %v2499 = vmax.f32 %v2425, %v2426
  %v2500 = vrot.slane %v2499, 4
  %v2501 = vmax.f32 %v2499, %v2500
  %v2502 = vrot.slane %v2501, 2
  %v2503 = vmax.f32 %v2501, %v2502
  %v2504 = vrot.slane %v2503, 1
  %v2505 = vmax.f32 %v2503, %v2504
  %v2506 = vmax.f32 %v2427, %v2428
  %v2507 = vrot.slane %v2506, 4
  %v2508 = vmax.f32 %v2506, %v2507
  %v2509 = vrot.slane %v2508, 2
  %v2510 = vmax.f32 %v2508, %v2509
  %v2511 = vrot.slane %v2510, 1
  %v2512 = vmax.f32 %v2510, %v2511
  %v2513 = vmax.f32 %v2429, %v2430
  %v2514 = vrot.slane %v2513, 4
  %v2515 = vmax.f32 %v2513, %v2514
  %v2516 = vrot.slane %v2515, 2
  %v2517 = vmax.f32 %v2515, %v2516
  %v2518 = vrot.slane %v2517, 1
  %v2519 = vmax.f32 %v2517, %v2518
  %v2520 = vmax.f32 %v2431, %v2432
  %v2521 = vrot.slane %v2520, 4
  %v2522 = vmax.f32 %v2520, %v2521
  %v2523 = vrot.slane %v2522, 2
  %v2524 = vmax.f32 %v2522, %v2523
  %v2525 = vrot.slane %v2524, 1
  %v2526 = vmax.f32 %v2524, %v2525
  %v2527 = vmax.f32 %v2433, %v2434
  %v2528 = vrot.slane %v2527, 4
  %v2529 = vmax.f32 %v2527, %v2528
  %v2530 = vrot.slane %v2529, 2
  %v2531 = vmax.f32 %v2529, %v2530
  %v2532 = vrot.slane %v2531, 1
  %v2533 = vmax.f32 %v2531, %v2532
  %v2534 = vmax.f32 %v2435, %v2436
  %v2535 = vrot.slane %v2534, 4
  %v2536 = vmax.f32 %v2534, %v2535
  %v2537 = vrot.slane %v2536, 2
  %v2538 = vmax.f32 %v2536, %v2537
  %v2539 = vrot.slane %v2538, 1
  %v2540 = vmax.f32 %v2538, %v2539
  %v2541 = vmax.f32 %v2437, %v2438
  %v2542 = vrot.slane %v2541, 4
  %v2543 = vmax.f32 %v2541, %v2542
  %v2544 = vrot.slane %v2543, 2
  %v2545 = vmax.f32 %v2543, %v2544
  %v2546 = vrot.slane %v2545, 1
  %v2547 = vmax.f32 %v2545, %v2546
  %v2548 = vmax.f32 %v2439, %v2440
  %v2549 = vrot.slane %v2548, 4
  %v2550 = vmax.f32 %v2548, %v2549
  %v2551 = vrot.slane %v2550, 2
  %v2552 = vmax.f32 %v2550, %v2551
  %v2553 = vrot.slane %v2552, 1
  %v2554 = vmax.f32 %v2552, %v2553
  %v2555 = vmax.f32 %v2441, %v2442
  %v2556 = vrot.slane %v2555, 4
  %v2557 = vmax.f32 %v2555, %v2556
  %v2558 = vrot.slane %v2557, 2
  %v2559 = vmax.f32 %v2557, %v2558
  %v2560 = vrot.slane %v2559, 1
  %v2561 = vmax.f32 %v2559, %v2560
  %v2562 = vmax.f32 %v2443, %v2444
  %v2563 = vrot.slane %v2562, 4
  %v2564 = vmax.f32 %v2562, %v2563
  %v2565 = vrot.slane %v2564, 2
  %v2566 = vmax.f32 %v2564, %v2565
  %v2567 = vrot.slane %v2566, 1
  %v2568 = vmax.f32 %v2566, %v2567
  %v2569 = vmax.f32 %v2445, %v2446
  %v2570 = vrot.slane %v2569, 4
  %v2571 = vmax.f32 %v2569, %v2570
  %v2572 = vrot.slane %v2571, 2
  %v2573 = vmax.f32 %v2571, %v2572
  %v2574 = vrot.slane %v2573, 1
  %v2575 = vmax.f32 %v2573, %v2574
  %v2576 = vmax.f32 %v2447, %v2448
  %v2577 = vrot.slane %v2576, 4
  %v2578 = vmax.f32 %v2576, %v2577
  %v2579 = vrot.slane %v2578, 2
  %v2580 = vmax.f32 %v2578, %v2579
  %v2581 = vrot.slane %v2580, 1
  %v2582 = vmax.f32 %v2580, %v2581
  %v2583 = vmax.f32 %v2449, %v2450
  %v2584 = vrot.slane %v2583, 4
  %v2585 = vmax.f32 %v2583, %v2584
  %v2586 = vrot.slane %v2585, 2
  %v2587 = vmax.f32 %v2585, %v2586
  %v2588 = vrot.slane %v2587, 1
  %v2589 = vmax.f32 %v2587, %v2588
  %v2590 = vmax.f32 %v2451, %v2452
  %v2591 = vrot.slane %v2590, 4
  %v2592 = vmax.f32 %v2590, %v2591
  %v2593 = vrot.slane %v2592, 2
  %v2594 = vmax.f32 %v2592, %v2593
  %v2595 = vrot.slane %v2594, 1
  %v2596 = vmax.f32 %v2594, %v2595
  %v2597 = vmax.f32 %v2453, %v2454
  %v2598 = vrot.slane %v2597, 4
  %v2599 = vmax.f32 %v2597, %v2598
  %v2600 = vrot.slane %v2599, 2
  %v2601 = vmax.f32 %v2599, %v2600
  %v2602 = vrot.slane %v2601, 1
  %v2603 = vmax.f32 %v2601, %v2602
  %v2604 = vmax.f32 %v2455, %v2456
  %v2605 = vrot.slane %v2604, 4
  %v2606 = vmax.f32 %v2604, %v2605
  %v2607 = vrot.slane %v2606, 2
  %v2608 = vmax.f32 %v2606, %v2607
  %v2609 = vrot.slane %v2608, 1
  %v2610 = vmax.f32 %v2608, %v2609
  %v2611 = vmax.f32 %v2457, %v2458
  %v2612 = vrot.slane %v2611, 4
  %v2613 = vmax.f32 %v2611, %v2612
  %v2614 = vrot.slane %v2613, 2
  %v2615 = vmax.f32 %v2613, %v2614
  %v2616 = vrot.slane %v2615, 1
  %v2617 = vmax.f32 %v2615, %v2616
  %v2618 = vmax.f32 %v2459, %v2460
  %v2619 = vrot.slane %v2618, 4
  %v2620 = vmax.f32 %v2618, %v2619
  %v2621 = vrot.slane %v2620, 2
  %v2622 = vmax.f32 %v2620, %v2621
  %v2623 = vrot.slane %v2622, 1
  %v2624 = vmax.f32 %v2622, %v2623
  %v2625 = vmax.f32 %v2461, %v2462
  %v2626 = vrot.slane %v2625, 4
  %v2627 = vmax.f32 %v2625, %v2626
  %v2628 = vrot.slane %v2627, 2
  %v2629 = vmax.f32 %v2627, %v2628
  %v2630 = vrot.slane %v2629, 1
  %v2631 = vmax.f32 %v2629, %v2630
  %v2632 = vmax.f32 %v2463, %v2464
  %v2633 = vrot.slane %v2632, 4
  %v2634 = vmax.f32 %v2632, %v2633
  %v2635 = vrot.slane %v2634, 2
  %v2636 = vmax.f32 %v2634, %v2635
  %v2637 = vrot.slane %v2636, 1
  %v2638 = vmax.f32 %v2636, %v2637
  %v2639 = vmax.f32 %v2465, %v2466
  %v2640 = vrot.slane %v2639, 4
  %v2641 = vmax.f32 %v2639, %v2640
  %v2642 = vrot.slane %v2641, 2
  %v2643 = vmax.f32 %v2641, %v2642
  %v2644 = vrot.slane %v2643, 1
  %v2645 = vmax.f32 %v2643, %v2644
  %v2646 = vmax.f32 %v2467, %v2468
  %v2647 = vrot.slane %v2646, 4
  %v2648 = vmax.f32 %v2646, %v2647
  %v2649 = vrot.slane %v2648, 2
  %v2650 = vmax.f32 %v2648, %v2649
  %v2651 = vrot.slane %v2650, 1
  %v2652 = vmax.f32 %v2650, %v2651
  %v2653 = vmax.f32 %v2469, %v2470
  %v2654 = vrot.slane %v2653, 4
  %v2655 = vmax.f32 %v2653, %v2654
  %v2656 = vrot.slane %v2655, 2
  %v2657 = vmax.f32 %v2655, %v2656
  %v2658 = vrot.slane %v2657, 1
  %v2659 = vmax.f32 %v2657, %v2658
  %v2660 = vmax.f32 %v2471, %v2472
  %v2661 = vrot.slane %v2660, 4
  %v2662 = vmax.f32 %v2660, %v2661
  %v2663 = vrot.slane %v2662, 2
  %v2664 = vmax.f32 %v2662, %v2663
  %v2665 = vrot.slane %v2664, 1
  %v2666 = vmax.f32 %v2664, %v2665
  %v2667 = vmax.f32 %v2473, %v2474
  %v2668 = vrot.slane %v2667, 4
  %v2669 = vmax.f32 %v2667, %v2668
  %v2670 = vrot.slane %v2669, 2
  %v2671 = vmax.f32 %v2669, %v2670
  %v2672 = vrot.slane %v2671, 1
  %v2673 = vmax.f32 %v2671, %v2672
  %v2674 = vmax.f32 %v2475, %v2476
  %v2675 = vrot.slane %v2674, 4
  %v2676 = vmax.f32 %v2674, %v2675
  %v2677 = vrot.slane %v2676, 2
  %v2678 = vmax.f32 %v2676, %v2677
  %v2679 = vrot.slane %v2678, 1
  %v2680 = vmax.f32 %v2678, %v2679
  %v2681 = vmax.f32 %v2477, %v2478
  %v2682 = vrot.slane %v2681, 4
  %v2683 = vmax.f32 %v2681, %v2682
  %v2684 = vrot.slane %v2683, 2
  %v2685 = vmax.f32 %v2683, %v2684
  %v2686 = vrot.slane %v2685, 1
  %v2687 = vmax.f32 %v2685, %v2686
  %v2688 = vmax.f32 %v2479, %v2480
  %v2689 = vrot.slane %v2688, 4
  %v2690 = vmax.f32 %v2688, %v2689
  %v2691 = vrot.slane %v2690, 2
  %v2692 = vmax.f32 %v2690, %v2691
  %v2693 = vrot.slane %v2692, 1
  %v2694 = vmax.f32 %v2692, %v2693
  %v2695 = vmax.f32 %v2481, %v2482
  %v2696 = vrot.slane %v2695, 4
  %v2697 = vmax.f32 %v2695, %v2696
  %v2698 = vrot.slane %v2697, 2
  %v2699 = vmax.f32 %v2697, %v2698
  %v2700 = vrot.slane %v2699, 1
  %v2701 = vmax.f32 %v2699, %v2700
  %v2702 = vmax.f32 %v2483, %v2484
  %v2703 = vrot.slane %v2702, 4
  %v2704 = vmax.f32 %v2702, %v2703
  %v2705 = vrot.slane %v2704, 2
  %v2706 = vmax.f32 %v2704, %v2705
  %v2707 = vrot.slane %v2706, 1
  %v2708 = vmax.f32 %v2706, %v2707
  %v2709 = vpack.c.bf16 %v2491, %v2491
  %v2710 = vpack.c.bf16 %v2498, %v2498
  %v2711 = vpack.c.bf16 %v2505, %v2505
  %v2712 = vpack.c.bf16 %v2512, %v2512
  %v2713 = vpack.c.bf16 %v2519, %v2519
  %v2714 = vpack.c.bf16 %v2526, %v2526
  %v2715 = vpack.c.bf16 %v2533, %v2533
  %v2716 = vpack.c.bf16 %v2540, %v2540
  %v2717 = vpack.c.bf16 %v2547, %v2547
  %v2718 = vpack.c.bf16 %v2554, %v2554
  %v2719 = vpack.c.bf16 %v2561, %v2561
  %v2720 = vpack.c.bf16 %v2568, %v2568
  %v2721 = vpack.c.bf16 %v2575, %v2575
  %v2722 = vpack.c.bf16 %v2582, %v2582
  %v2723 = vpack.c.bf16 %v2589, %v2589
  %v2724 = vpack.c.bf16 %v2596, %v2596
  %v2725 = vpack.c.bf16 %v2603, %v2603
  %v2726 = vpack.c.bf16 %v2610, %v2610
  %v2727 = vpack.c.bf16 %v2617, %v2617
  %v2728 = vpack.c.bf16 %v2624, %v2624
  %v2729 = vpack.c.bf16 %v2631, %v2631
  %v2730 = vpack.c.bf16 %v2638, %v2638
  %v2731 = vpack.c.bf16 %v2645, %v2645
  %v2732 = vpack.c.bf16 %v2652, %v2652
  %v2733 = vpack.c.bf16 %v2659, %v2659
  %v2734 = vpack.c.bf16 %v2666, %v2666
  %v2735 = vpack.c.bf16 %v2673, %v2673
  %v2736 = vpack.c.bf16 %v2680, %v2680
  %v2737 = vpack.c.bf16 %v2687, %v2687
  %v2738 = vpack.c.bf16 %v2694, %v2694
  %v2739 = vpack.c.bf16 %v2701, %v2701
  %v2740 = vpack.c.bf16 %v2708, %v2708
  %s2741 = scalar_lea.vmem %s4, 128
  %v2742 = vld [vmem:[%s2741] sm:$0xf]
  %v2743 = vld [vmem:[%s2741 + $0x4] sm:$0xf]
  %v2744 = vld [vmem:[%s2741 + $0x8] sm:$0xf]
  %v2745 = vld [vmem:[%s2741 + $0xc] sm:$0xf]
  %v2746 = vld [vmem:[%s2741 + $0x10] sm:$0xf]
  %v2747 = vld [vmem:[%s2741 + $0x14] sm:$0xf]
  %v2748 = vld [vmem:[%s2741 + $0x18] sm:$0xf]
  %v2749 = vld [vmem:[%s2741 + $0x1c] sm:$0xf]
  %v2750 = vld [vmem:[%s2741 + $0x20] sm:$0xf]
  %v2751 = vld [vmem:[%s2741 + $0x24] sm:$0xf]
  %v2752 = vld [vmem:[%s2741 + $0x28] sm:$0xf]
  %v2753 = vld [vmem:[%s2741 + $0x2c] sm:$0xf]
  %v2754 = vld [vmem:[%s2741 + $0x30] sm:$0xf]
  %v2755 = vld [vmem:[%s2741 + $0x34] sm:$0xf]
  %v2756 = vld [vmem:[%s2741 + $0x38] sm:$0xf]
  %v2757 = vld [vmem:[%s2741 + $0x3c] sm:$0xf]
  %v2758 = vlaneseq
  %v2759 = vshrl.u32 %v2758, 7
  %v2760 = vsub.s32 0, %v2759
  %v2761 = vrot.slane %v27, %v2760
  %v2794 = vunpack.c.l.b16 %v2709
  %v2795 = vunpack.c.l.b16 %v2710
  %v2796 = vunpack.c.l.b16 %v2711
  %v2797 = vunpack.c.l.b16 %v2712
  %v2798 = vunpack.c.l.b16 %v2713
  %v2799 = vunpack.c.l.b16 %v2714
  %v2800 = vunpack.c.l.b16 %v2715
  %v2801 = vunpack.c.l.b16 %v2716
  %v2802 = vunpack.c.l.b16 %v2717
  %v2803 = vunpack.c.l.b16 %v2718
  %v2804 = vunpack.c.l.b16 %v2719
  %v2805 = vunpack.c.l.b16 %v2720
  %v2806 = vunpack.c.l.b16 %v2721
  %v2807 = vunpack.c.l.b16 %v2722
  %v2808 = vunpack.c.l.b16 %v2723
  %v2809 = vunpack.c.l.b16 %v2724
  %v2810 = vunpack.c.l.b16 %v2725
  %v2811 = vunpack.c.l.b16 %v2726
  %v2812 = vunpack.c.l.b16 %v2727
  %v2813 = vunpack.c.l.b16 %v2728
  %v2814 = vunpack.c.l.b16 %v2729
  %v2815 = vunpack.c.l.b16 %v2730
  %v2816 = vunpack.c.l.b16 %v2731
  %v2817 = vunpack.c.l.b16 %v2732
  %v2818 = vunpack.c.l.b16 %v2733
  %v2819 = vunpack.c.l.b16 %v2734
  %v2820 = vunpack.c.l.b16 %v2735
  %v2821 = vunpack.c.l.b16 %v2736
  %v2822 = vunpack.c.l.b16 %v2737
  %v2823 = vunpack.c.l.b16 %v2738
  %v2824 = vunpack.c.l.b16 %v2739
  %v2825 = vunpack.c.l.b16 %v2740
  %vm2826 = vcmask 1041409
  %v2827 = vsel %vm2826, %v2795, %v2794
  %vm2828 = vcmask 1042434
  %v2829 = vsel %vm2828, %v2796, %v2827
  %vm2830 = vcmask 1043459
  %v2831 = vsel %vm2830, %v2797, %v2829
  %vm2832 = vcmask 1044484
  %v2833 = vsel %vm2832, %v2798, %v2831
  %vm2834 = vcmask 1045509
  %v2835 = vsel %vm2834, %v2799, %v2833
  %vm2836 = vcmask 1046534
  %v2837 = vsel %vm2836, %v2800, %v2835
  %vm2838 = vcmask 1047559
  %v2839 = vsel %vm2838, %v2801, %v2837
  %v2840 = vsel %vm2826, %v2803, %v2802
  %v2841 = vsel %vm2828, %v2804, %v2840
  %v2842 = vsel %vm2830, %v2805, %v2841
  %v2843 = vsel %vm2832, %v2806, %v2842
  %v2844 = vsel %vm2834, %v2807, %v2843
  %v2845 = vsel %vm2836, %v2808, %v2844
  %v2846 = vsel %vm2838, %v2809, %v2845
  %v2847 = vsel %vm2826, %v2811, %v2810
  %v2848 = vsel %vm2828, %v2812, %v2847
  %v2849 = vsel %vm2830, %v2813, %v2848
  %v2850 = vsel %vm2832, %v2814, %v2849
  %v2851 = vsel %vm2834, %v2815, %v2850
  %v2852 = vsel %vm2836, %v2816, %v2851
  %v2853 = vsel %vm2838, %v2817, %v2852
  %v2854 = vsel %vm2826, %v2819, %v2818
  %v2855 = vsel %vm2828, %v2820, %v2854
  %v2856 = vsel %vm2830, %v2821, %v2855
  %v2857 = vsel %vm2832, %v2822, %v2856
  %v2858 = vsel %vm2834, %v2823, %v2857
  %v2859 = vsel %vm2836, %v2824, %v2858
  %v2860 = vsel %vm2838, %v2825, %v2859
  %v2861 = vpack.c.b16 %v2846, %v2839
  %v2862 = vpack.c.b16 %v2860, %v2853
  %v2881 = vunpack.c.l.b16 %v2742
  %v2882 = vunpack.c.l.b16 %v2743
  %v2883 = vunpack.c.l.b16 %v2744
  %v2884 = vunpack.c.l.b16 %v2745
  %v2885 = vunpack.c.l.b16 %v2746
  %v2886 = vunpack.c.l.b16 %v2747
  %v2887 = vunpack.c.l.b16 %v2748
  %v2888 = vunpack.c.l.b16 %v2749
  %v2889 = vunpack.c.l.b16 %v2750
  %v2890 = vunpack.c.l.b16 %v2751
  %v2891 = vunpack.c.l.b16 %v2752
  %v2892 = vunpack.c.l.b16 %v2753
  %v2893 = vunpack.c.l.b16 %v2754
  %v2894 = vunpack.c.l.b16 %v2755
  %v2895 = vunpack.c.l.b16 %v2756
  %v2896 = vunpack.c.l.b16 %v2757
  %v2897 = vpack.c.b16 %v2882, %v2881
  %v2898 = vpack.c.b16 %v2884, %v2883
  %v2899 = vpack.c.b16 %v2886, %v2885
  %v2900 = vpack.c.b16 %v2888, %v2887
  %v2901 = vpack.c.b16 %v2890, %v2889
  %v2902 = vpack.c.b16 %v2892, %v2891
  %v2903 = vpack.c.b16 %v2894, %v2893
  %v2904 = vpack.c.b16 %v2896, %v2895
  %2913 = vmatprep.subr.bf16.mxu0 0
  %2914 = vmatpush1.bf16.msra.mxu0 %v2897
  %2915 = vmatprep.subr.bf16.mxu0 0
  %2916 = vmatpush1.bf16.msra.mxu0 %v2898
  %2917 = vmatprep.subr.bf16.mxu0 0
  %2918 = vmatpush1.bf16.msra.mxu0 %v2899
  %2919 = vmatprep.subr.bf16.mxu0 0
  %2920 = vmatpush1.bf16.msra.mxu0 %v2900
  %2921 = vmatprep.subr.bf16.mxu0 0
  %2922 = vmatpush1.bf16.msra.mxu0 %v2901
  %2923 = vmatprep.subr.bf16.mxu0 0
  %2924 = vmatpush1.bf16.msra.mxu0 %v2902
  %2925 = vmatprep.subr.bf16.mxu0 0
  %2926 = vmatpush1.bf16.msra.mxu0 %v2903
  %2927 = vmatprep.subr.bf16.mxu0 0
  %2928 = vmatpush1.bf16.msra.mxu0 %v2904
  %2929 = vmatprep.subr.bf16.mxu0 0
  %2930 = vmatpush1.bf16.msra.mxu0 0
  %2931 = vmatprep.subr.bf16.mxu0 0
  %2932 = vmatpush1.bf16.msra.mxu0 0
  %2933 = vmatprep.subr.bf16.mxu0 0
  %2934 = vmatpush1.bf16.msra.mxu0 0
  %2935 = vmatprep.subr.bf16.mxu0 0
  %2936 = vmatpush1.bf16.msra.mxu0 0
  %2937 = vmatprep.subr.bf16.mxu0 0
  %2938 = vmatpush1.bf16.msra.mxu0 0
  %2939 = vmatprep.subr.bf16.mxu0 0
  %2940 = vmatpush1.bf16.msra.mxu0 0
  %2941 = vmatprep.subr.bf16.mxu0 0
  %2942 = vmatpush1.bf16.msra.mxu0 0
  %2943 = vmatprep.subr.bf16.mxu0 0
  %2944 = vmatpush1.bf16.msra.mxu0 0
  %2945 = vmatprep.mubr.bf16.mxu0 0
  %2946 = vmatmul.mubr.bf16.gmra.mrb[0].mxu0 %v2861
  %v2947 = vpop.f32.mrb[0].mxu0
  %v2948 = vadd.f32 %v2761, %v2947
  %v2949 = vpop.f32.mrb[0].mxu0
  %v2950 = vpop.f32.mrb[0].mxu0
  %v2951 = vadd.f32 %v2761, %v2950
  %v2952 = vpop.f32.mrb[0].mxu0
  %2953 = vmatprep.mubr.bf16.mxu0 0
  %2954 = vmatmul.mubr.bf16.gmra.mrb[0].mxu0 %v2862
  %v2955 = vpop.f32.mrb[0].mxu0
  %v2956 = vadd.f32 %v2761, %v2955
  %v2957 = vpop.f32.mrb[0].mxu0
  %v2958 = vpop.f32.mrb[0].mxu0
  %v2959 = vadd.f32 %v2761, %v2958
  %v2960 = vpop.f32.mrb[0].mxu0
  %2961 = vdwg.mxu0
  %v2962 = vmax.f32 %v2948, 0.0
  %v2963 = vmax.f32 %v2951, 0.0
  %v2964 = vmax.f32 %v2956, 0.0
  %v2965 = vmax.f32 %v2959, 0.0
  %v2966 = vpack.c.bf16 %v2963, %v2962
  %v2967 = vpack.c.bf16 %v2965, %v2964
  %s2968 = scalar_lea.vmem %s4, 192
  %v2969 = vld [vmem:[%s2968] sm:$0xf]
  %v2970 = vld [vmem:[%s2968 + $0x4] sm:$0xf]
  %v2971 = vld [vmem:[%s2968 + $0x8] sm:$0xf]
  %v2972 = vld [vmem:[%s2968 + $0xc] sm:$0xf]
  %v2973 = vld [vmem:[%s2968 + $0x10] sm:$0xf]
  %v2974 = vld [vmem:[%s2968 + $0x14] sm:$0xf]
  %v2975 = vld [vmem:[%s2968 + $0x18] sm:$0xf]
  %v2976 = vld [vmem:[%s2968 + $0x1c] sm:$0xf]
  %v2977 = vld [vmem:[%s2968 + $0x20] sm:$0xf]
  %v2978 = vld [vmem:[%s2968 + $0x24] sm:$0xf]
  %v2979 = vld [vmem:[%s2968 + $0x28] sm:$0xf]
  %v2980 = vld [vmem:[%s2968 + $0x2c] sm:$0xf]
  %v2981 = vld [vmem:[%s2968 + $0x30] sm:$0xf]
  %v2982 = vld [vmem:[%s2968 + $0x34] sm:$0xf]
  %v2983 = vld [vmem:[%s2968 + $0x38] sm:$0xf]
  %v2984 = vld [vmem:[%s2968 + $0x3c] sm:$0xf]
  %v2985 = vlaneseq
  %v2986 = vshrl.u32 %v2985, 7
  %v2987 = vsub.s32 0, %v2986
  %v2988 = vrot.slane %v28, %v2987
  %v3005 = vunpack.c.l.b16 %v2969
  %v3006 = vunpack.c.l.b16 %v2970
  %v3007 = vunpack.c.l.b16 %v2971
  %v3008 = vunpack.c.l.b16 %v2972
  %v3009 = vunpack.c.l.b16 %v2973
  %v3010 = vunpack.c.l.b16 %v2974
  %v3011 = vunpack.c.l.b16 %v2975
  %v3012 = vunpack.c.l.b16 %v2976
  %v3013 = vunpack.c.l.b16 %v2977
  %v3014 = vunpack.c.l.b16 %v2978
  %v3015 = vunpack.c.l.b16 %v2979
  %v3016 = vunpack.c.l.b16 %v2980
  %v3017 = vunpack.c.l.b16 %v2981
  %v3018 = vunpack.c.l.b16 %v2982
  %v3019 = vunpack.c.l.b16 %v2983
  %v3020 = vunpack.c.l.b16 %v2984
  %v3021 = vpack.c.b16 %v3006, %v3005
  %v3022 = vpack.c.b16 %v3008, %v3007
  %v3023 = vpack.c.b16 %v3010, %v3009
  %v3024 = vpack.c.b16 %v3012, %v3011
  %v3025 = vpack.c.b16 %v3014, %v3013
  %v3026 = vpack.c.b16 %v3016, %v3015
  %v3027 = vpack.c.b16 %v3018, %v3017
  %v3028 = vpack.c.b16 %v3020, %v3019
  %3037 = vmatprep.subr.bf16.mxu0 0
  %3038 = vmatpush1.bf16.msra.mxu0 %v3021
  %3039 = vmatprep.subr.bf16.mxu0 0
  %3040 = vmatpush1.bf16.msra.mxu0 %v3022
  %3041 = vmatprep.subr.bf16.mxu0 0
  %3042 = vmatpush1.bf16.msra.mxu0 %v3023
  %3043 = vmatprep.subr.bf16.mxu0 0
  %3044 = vmatpush1.bf16.msra.mxu0 %v3024
  %3045 = vmatprep.subr.bf16.mxu0 0
  %3046 = vmatpush1.bf16.msra.mxu0 %v3025
  %3047 = vmatprep.subr.bf16.mxu0 0
  %3048 = vmatpush1.bf16.msra.mxu0 %v3026
  %3049 = vmatprep.subr.bf16.mxu0 0
  %3050 = vmatpush1.bf16.msra.mxu0 %v3027
  %3051 = vmatprep.subr.bf16.mxu0 0
  %3052 = vmatpush1.bf16.msra.mxu0 %v3028
  %3053 = vmatprep.subr.bf16.mxu0 0
  %3054 = vmatpush1.bf16.msra.mxu0 0
  %3055 = vmatprep.subr.bf16.mxu0 0
  %3056 = vmatpush1.bf16.msra.mxu0 0
  %3057 = vmatprep.subr.bf16.mxu0 0
  %3058 = vmatpush1.bf16.msra.mxu0 0
  %3059 = vmatprep.subr.bf16.mxu0 0
  %3060 = vmatpush1.bf16.msra.mxu0 0
  %3061 = vmatprep.subr.bf16.mxu0 0
  %3062 = vmatpush1.bf16.msra.mxu0 0
  %3063 = vmatprep.subr.bf16.mxu0 0
  %3064 = vmatpush1.bf16.msra.mxu0 0
  %3065 = vmatprep.subr.bf16.mxu0 0
  %3066 = vmatpush1.bf16.msra.mxu0 0
  %3067 = vmatprep.subr.bf16.mxu0 0
  %3068 = vmatpush1.bf16.msra.mxu0 0
  %3069 = vmatprep.mubr.bf16.mxu0 0
  %3070 = vmatmul.mubr.bf16.gmra.mrb[0].mxu0 %v2966
  %v3071 = vpop.f32.mrb[0].mxu0
  %v3072 = vadd.f32 %v2988, %v3071
  %v3073 = vpop.f32.mrb[0].mxu0
  %v3074 = vpop.f32.mrb[0].mxu0
  %v3075 = vadd.f32 %v2988, %v3074
  %v3076 = vpop.f32.mrb[0].mxu0
  %3077 = vmatprep.mubr.bf16.mxu0 0
  %3078 = vmatmul.mubr.bf16.gmra.mrb[0].mxu0 %v2967
  %v3079 = vpop.f32.mrb[0].mxu0
  %v3080 = vadd.f32 %v2988, %v3079
  %v3081 = vpop.f32.mrb[0].mxu0
  %v3082 = vpop.f32.mrb[0].mxu0
  %v3083 = vadd.f32 %v2988, %v3082
  %v3084 = vpop.f32.mrb[0].mxu0
  %3085 = vdwg.mxu0
  %v3086 = vmax.f32 %v3072, 0.0
  %v3087 = vmax.f32 %v3075, 0.0
  %v3088 = vmax.f32 %v3080, 0.0
  %v3089 = vmax.f32 %v3083, 0.0
  %v3090 = vpack.c.bf16 %v3087, %v3086
  %v3091 = vpack.c.bf16 %v3089, %v3088
  %s3092 = scalar_lea.vmem %s4, 256
  %v3093 = vld [vmem:[%s3092] sm:$0xf]
  %v3094 = vld [vmem:[%s3092 + $0x4] sm:$0xf]
  %v3095 = vld [vmem:[%s3092 + $0x8] sm:$0xf]
  %v3096 = vld [vmem:[%s3092 + $0xc] sm:$0xf]
  %v3097 = vld [vmem:[%s3092 + $0x10] sm:$0xf]
  %v3098 = vld [vmem:[%s3092 + $0x14] sm:$0xf]
  %v3099 = vld [vmem:[%s3092 + $0x18] sm:$0xf]
  %v3100 = vld [vmem:[%s3092 + $0x1c] sm:$0xf]
  %v3101 = vld [vmem:[%s3092 + $0x20] sm:$0xf]
  %v3102 = vld [vmem:[%s3092 + $0x24] sm:$0xf]
  %v3103 = vld [vmem:[%s3092 + $0x28] sm:$0xf]
  %v3104 = vld [vmem:[%s3092 + $0x2c] sm:$0xf]
  %v3105 = vld [vmem:[%s3092 + $0x30] sm:$0xf]
  %v3106 = vld [vmem:[%s3092 + $0x34] sm:$0xf]
  %v3107 = vld [vmem:[%s3092 + $0x38] sm:$0xf]
  %v3108 = vld [vmem:[%s3092 + $0x3c] sm:$0xf]
  %v3109 = vlaneseq
  %v3110 = vshrl.u32 %v3109, 7
  %v3111 = vsub.s32 0, %v3110
  %v3112 = vrot.slane %v29, %v3111
  %v3129 = vunpack.c.l.b16 %v3093
  %v3130 = vunpack.c.l.b16 %v3094
  %v3131 = vunpack.c.l.b16 %v3095
  %v3132 = vunpack.c.l.b16 %v3096
  %v3133 = vunpack.c.l.b16 %v3097
  %v3134 = vunpack.c.l.b16 %v3098
  %v3135 = vunpack.c.l.b16 %v3099
  %v3136 = vunpack.c.l.b16 %v3100
  %v3137 = vunpack.c.l.b16 %v3101
  %v3138 = vunpack.c.l.b16 %v3102
  %v3139 = vunpack.c.l.b16 %v3103
  %v3140 = vunpack.c.l.b16 %v3104
  %v3141 = vunpack.c.l.b16 %v3105
  %v3142 = vunpack.c.l.b16 %v3106
  %v3143 = vunpack.c.l.b16 %v3107
  %v3144 = vunpack.c.l.b16 %v3108
  %v3145 = vpack.c.b16 %v3130, %v3129
  %v3146 = vpack.c.b16 %v3132, %v3131
  %v3147 = vpack.c.b16 %v3134, %v3133
  %v3148 = vpack.c.b16 %v3136, %v3135
  %v3149 = vpack.c.b16 %v3138, %v3137
  %v3150 = vpack.c.b16 %v3140, %v3139
  %v3151 = vpack.c.b16 %v3142, %v3141
  %v3152 = vpack.c.b16 %v3144, %v3143
  %3161 = vmatprep.subr.bf16.mxu0 0
  %3162 = vmatpush1.bf16.msra.mxu0 %v3145
  %3163 = vmatprep.subr.bf16.mxu0 0
  %3164 = vmatpush1.bf16.msra.mxu0 %v3146
  %3165 = vmatprep.subr.bf16.mxu0 0
  %3166 = vmatpush1.bf16.msra.mxu0 %v3147
  %3167 = vmatprep.subr.bf16.mxu0 0
  %3168 = vmatpush1.bf16.msra.mxu0 %v3148
  %3169 = vmatprep.subr.bf16.mxu0 0
  %3170 = vmatpush1.bf16.msra.mxu0 %v3149
  %3171 = vmatprep.subr.bf16.mxu0 0
  %3172 = vmatpush1.bf16.msra.mxu0 %v3150
  %3173 = vmatprep.subr.bf16.mxu0 0
  %3174 = vmatpush1.bf16.msra.mxu0 %v3151
  %3175 = vmatprep.subr.bf16.mxu0 0
  %3176 = vmatpush1.bf16.msra.mxu0 %v3152
  %3177 = vmatprep.subr.bf16.mxu0 0
  %3178 = vmatpush1.bf16.msra.mxu0 0
  %3179 = vmatprep.subr.bf16.mxu0 0
  %3180 = vmatpush1.bf16.msra.mxu0 0
  %3181 = vmatprep.subr.bf16.mxu0 0
  %3182 = vmatpush1.bf16.msra.mxu0 0
  %3183 = vmatprep.subr.bf16.mxu0 0
  %3184 = vmatpush1.bf16.msra.mxu0 0
  %3185 = vmatprep.subr.bf16.mxu0 0
  %3186 = vmatpush1.bf16.msra.mxu0 0
  %3187 = vmatprep.subr.bf16.mxu0 0
  %3188 = vmatpush1.bf16.msra.mxu0 0
  %3189 = vmatprep.subr.bf16.mxu0 0
  %3190 = vmatpush1.bf16.msra.mxu0 0
  %3191 = vmatprep.subr.bf16.mxu0 0
  %3192 = vmatpush1.bf16.msra.mxu0 0
  %3193 = vmatprep.mubr.bf16.mxu0 0
  %3194 = vmatmul.mubr.bf16.gmra.mrb[0].mxu0 %v3090
  %v3195 = vpop.f32.mrb[0].mxu0
  %v3196 = vadd.f32 %v3112, %v3195
  %v3197 = vpop.f32.mrb[0].mxu0
  %v3198 = vpop.f32.mrb[0].mxu0
  %v3199 = vadd.f32 %v3112, %v3198
  %v3200 = vpop.f32.mrb[0].mxu0
  %3201 = vmatprep.mubr.bf16.mxu0 0
  %3202 = vmatmul.mubr.bf16.gmra.mrb[0].mxu0 %v3091
  %v3203 = vpop.f32.mrb[0].mxu0
  %v3204 = vadd.f32 %v3112, %v3203
  %v3205 = vpop.f32.mrb[0].mxu0
  %v3206 = vpop.f32.mrb[0].mxu0
  %v3207 = vadd.f32 %v3112, %v3206
  %v3208 = vpop.f32.mrb[0].mxu0
  %3209 = vdwg.mxu0
  %3210 = vst [vmem:[%s6] sm:$0xff] %v3196
  %3211 = vst [vmem:[%s6 + $0x8] sm:$0xff] %v3199
  %3212 = vst [vmem:[%s6 + $0x10] sm:$0xff] %v3204
  %3213 = vst [vmem:[%s6 + $0x18] sm:$0xff] %v3207
  // Predicated region
  $region26: #{proposal_module_forward.1} parent=0 // pred_check
    _
  $region27: #{proposal_module_forward.1} parent=0 // pred_check_branch
    %3215 = sbr.rel (0) target = $region29
  $region28: #{proposal_module_forward.1} parent=0 // pred_region
    _
  $region29: #{proposal_module_forward.1} parent=0 // pred_fallthru
    _
  // Predicated region
  $region30: #{proposal_module_forward.1} parent=0 // pred_check
    _
  $region31: #{proposal_module_forward.1} parent=0 // pred_check_branch
    %3217 = sbr.rel (0) target = $region33
  $region32: #{proposal_module_forward.1} parent=0 // pred_region
    _
  $region33: #{proposal_module_forward.1} parent=0 // pred_fallthru
    _

</llo_original>
